<compile_context>
chip_gen: v6e
topology: v6e:2x2x1
jax: 0.10.0
libtpu: 0.0.40
codegen_flags: <defaults>
</compile_context>

<pallas_src>
import math
import jax
import jax.numpy as jnp
from jax.experimental import pallas as pl
from jax.experimental.pallas import tpu as pltpu


def s4_tail_kernel(yc_ref, w_ref, b_ref, o_ref):
    # yc_ref: (1, H, Lt) f32 conv output (skip already folded into the kernel).
    # w_ref : (2H, H) bf16 merged output_linear weight.
    # b_ref : (2H, 1) f32 merged bias.
    H = o_ref.shape[1]

    # TODO(synk): torch.nn.GELU defaults to the exact erf form; erf is not
    # reliably lowerable in Mosaic, so the tanh approximation is used here.
    y = jax.nn.gelu(yc_ref[0], approximate=True)               # (H, Lt) f32, VPU+EUP

    # One lane-aligned MXU matmul in the transposed layout Z = W @ Y, bf16
    # operands with f32 accumulation; GLU split at row H is sublane-aligned.
    z = jnp.dot(w_ref[...], y.astype(jnp.bfloat16),
                preferred_element_type=jnp.float32) + b_ref[...]   # (2H, Lt) f32
    o_ref[0] = z[:H] * jax.nn.sigmoid(z[H:])                   # full-lane store


def s4_block_forward(x_bhl, k_hl, D, W, bias, *, l_tile=256):
    """x_bhl: (B, H, L) float32 (transposed=True convention, as in PyTorch).

    k_hl: (H, L) SSM conv kernel (channels=1); D: (1, H); W: (2H, H); bias: (2H,)
    Returns (y, next_state=None) with y of shape (B, H, L).
    """
    B, H, L = x_bhl.shape

    # --- Fold the D skip into the convolution kernel: x*D == conv(x, D*delta),
    # exact up to FFT rounding.  Removes one streamed input from the kernel.
    k_hl = k_hl.at[:, 0].add(D.reshape(H))

    # --- FFTConv convolution hot path, kept in XLA (no FFT primitive in Pallas).
    n = 2 * L                                           # l_kernel + L
    k_f = jnp.fft.rfft(k_hl, n=n)                       # (H, n//2+1)
    x_f = jnp.fft.rfft(x_bhl, n=n)                      # (B, H, n//2+1)
    y_conv = jnp.fft.irfft(x_f * k_f[None], n=n)[..., :L].astype(jnp.float32)

    # --- parameter layouts for the fused tail kernel (lane-aligned, merged)
    W_bf16 = W.astype(jnp.bfloat16)                     # (2H, H), resident weight
    b_col = bias.reshape(2 * H, 1).astype(jnp.float32)  # (2H, 1)

    Lt = L if L <= l_tile else l_tile
    assert L % Lt == 0, (L, Lt)
    grid = (B, L // Lt)

    out = pl.pallas_call(
        s4_tail_kernel,
        out_shape=jax.ShapeDtypeStruct((B, H, L), jnp.float32),
        grid=grid,
        in_specs=[
            pl.BlockSpec((1, H, Lt), lambda b, l: (b, 0, l)),   # conv output tile
            pl.BlockSpec((2 * H, H), lambda b, l: (0, 0)),      # merged weight (resident)
            pl.BlockSpec((2 * H, 1), lambda b, l: (0, 0)),      # merged bias (resident)
        ],
        out_specs=pl.BlockSpec((1, H, Lt), lambda b, l: (b, 0, l)),
        compiler_params=pltpu.CompilerParams(
            dimension_semantics=("parallel", "parallel")),
    )(y_conv, W_bf16, b_col)
    return out, None                                    # (y, next_state)


def make_ssm_conv_kernel(key, H, L, N=16, dt_min=1e-3, dt_max=1e-1):
    """Materialize the SSM convolution kernel k, shape (H, L) (channels=1)."""
    # TODO(synk): full 'dplr' (NPLR / Cauchy-kernel) generation is not replicated;
    # k is produced via a diagonal (S4D-Lin) SSM with ZOH discretization in plain
    # JAX glue (real arithmetic throughout, no Pallas path needed).
    k_dt, k_c = jax.random.split(key)
    n = N // 2
    A_re = jnp.broadcast_to(jnp.float32(-0.5), (H, n))
    A_im = jnp.broadcast_to(jnp.pi * jnp.arange(n, dtype=jnp.float32), (H, n))
    log_dt = jax.random.uniform(k_dt, (H,), minval=math.log(dt_min),
                                maxval=math.log(dt_max))
    dt = jnp.exp(log_dt)                                          # (H,)
    C = jax.random.normal(k_c, (H, n, 2), dtype=jnp.float32) * (0.5 ** 0.5)
    C_re, C_im = C[..., 0], C[..., 1]

    dtA_re = A_re * dt[:, None]
    dtA_im = A_im * dt[:, None]
    # dB = (exp(dt*A) - 1) / A   (B = 1)
    eR = jnp.exp(dtA_re)
    num_re = eR * jnp.cos(dtA_im) - 1.0
    num_im = eR * jnp.sin(dtA_im)
    den = A_re ** 2 + A_im ** 2
    dB_re = (num_re * A_re + num_im * A_im) / den
    dB_im = (num_im * A_re - num_re * A_im) / den
    # w = C * dB
    w_re = C_re * dB_re - C_im * dB_im
    w_im = C_re * dB_im + C_im * dB_re
    # k[h, l] = 2 * Re( sum_n w * exp(dt*A)^l )
    l = jnp.arange(L, dtype=jnp.float32)
    er = jnp.exp(dtA_re[:, :, None] * l)                          # (H, n, L)
    e_re = er * jnp.cos(dtA_im[:, :, None] * l)
    e_im = er * jnp.sin(dtA_im[:, :, None] * l)
    k_hl = 2.0 * jnp.sum(w_re[:, :, None] * e_re - w_im[:, :, None] * e_im, axis=1)
    return k_hl.astype(jnp.float32)                               # (H, L)


def reference_forward(x_bhl, k_hl, D, W, bias, *, bf16_matmul=False):
    """Plain-JAX reference mirroring the PyTorch S4Block forward (FFT path).

    bf16_matmul=True mirrors the kernel's bf16-operand / f32-accumulate matmul
    so the kernel can be validated at tight tolerance; bf16_matmul=False is the
    f32 HIGHEST-precision module-semantics reference (looser check).
    """
    B, H, L = x_bhl.shape
    n = 2 * L                                                     # l_kernel + L
    k_f = jnp.fft.rfft(k_hl, n=n)                                 # (H, n//2+1)
    x_f = jnp.fft.rfft(x_bhl, n=n)                                # (B, H, n//2+1)
    y = jnp.fft.irfft(x_f * k_f[None], n=n)[..., :L]              # (B, H, L)
    y = y + x_bhl * D[0][None, :, None]
    y = jax.nn.gelu(jnp.transpose(y, (0, 2, 1)), approximate=True)  # (B, L, H)
    if bf16_matmul:
        z = jnp.dot(y.astype(jnp.bfloat16), W.astype(jnp.bfloat16).T,
                    preferred_element_type=jnp.float32) + bias
    else:
        z = jnp.dot(y, W.T, precision=jax.lax.Precision.HIGHEST) + bias
    out = z[..., :H] * jax.nn.sigmoid(z[..., H:])
    return jnp.transpose(out, (0, 2, 1))                          # (B, H, L)


if __name__ == "__main__":
    B, H, L = 2, 128, 512          # batch, d_model, sequence length
    key = jax.random.PRNGKey(0)
    kx, kk, kd, kw, kb = jax.random.split(key, 5)

    x = jax.random.normal(kx, (B, H, L), dtype=jnp.float32)       # (B, H, L), transposed=True
    k_hl = make_ssm_conv_kernel(kk, H, L)                         # (H, L)
    D = jax.random.normal(kd, (1, H), dtype=jnp.float32)          # FFTConv.D, channels=1
    W = jax.random.normal(kw, (2 * H, H), dtype=jnp.float32) / math.sqrt(H)
    bias = jax.random.normal(kb, (2 * H,), dtype=jnp.float32) * 0.02

    fwd = jax.jit(s4_block_forward)
    y, state = fwd(x, k_hl, D, W, bias)
    y = jax.block_until_ready(y)
    assert y.shape == x.shape, (y.shape, x.shape)

    # Tight check vs a reference that mirrors the kernel's precision choices
    # (bf16 matmul operands, f32 accumulation) — validates the Pallas kernel.
    ref_matched = reference_forward(x, k_hl, D, W, bias, bf16_matmul=True)
    err_matched = float(jnp.max(jnp.abs(y - ref_matched)))
    assert jnp.allclose(y, ref_matched, rtol=2e-3, atol=2e-3), err_matched

    # Looser check vs the f32 HIGHEST-precision module-semantics reference —
    # bounds the bf16-operand error against the original forward pass.
    ref_f32 = reference_forward(x, k_hl, D, W, bias, bf16_matmul=False)
    err_f32 = float(jnp.max(jnp.abs(y - ref_f32)))
    assert jnp.allclose(y, ref_f32, rtol=5e-2, atol=5e-2), err_f32

    print("KERNEL_OK")
</pallas_src>

<mosaic_0001>
module attributes {stable_mosaic.version = 11 : i64} {
  func.func @s4_tail_kernel(%arg0: i32, %arg1: i32, %arg2: memref<1x128x256xf32, #tpu.memory_space<vmem>>, %arg3: memref<256x128xbf16, #tpu.memory_space<vmem>>, %arg4: memref<256x1xf32, #tpu.memory_space<vmem>>, %arg5: memref<1x128x256xf32, #tpu.memory_space<vmem>>) attributes {dimension_semantics = [#tpu.dimension_semantics<parallel>, #tpu.dimension_semantics<parallel>], iteration_bounds = array<i64: 2, 2>, scalar_prefetch = 0 : i64, scratch_operands = 0 : i64, tpu.core_type = #tpu.core_type<tc>, window_params = [{transform_indices = @transform_0, window_bounds = array<i64: 1, 128, 256>}, {pipeline_mode = #tpu.pipeline_mode<synchronous>, transform_indices = @transform_1, window_bounds = array<i64: 256, 128>}, {pipeline_mode = #tpu.pipeline_mode<synchronous>, transform_indices = @transform_2, window_bounds = array<i64: 256, 1>}, {transform_indices = @transform_3, window_bounds = array<i64: 1, 128, 256>}]} {
    %c0 = arith.constant 0 : index
    %c0_0 = arith.constant 0 : index
    %c0_1 = arith.constant 0 : index
    %0 = vector.load %arg2[%c0, %c0_0, %c0_1] : memref<1x128x256xf32, #tpu.memory_space<vmem>>, vector<1x128x256xf32>
    %1 = vector.shape_cast %0 : vector<1x128x256xf32> to vector<128x256xf32>
    %2 = arith.mulf %1, %1 : vector<128x256xf32>
    %3 = arith.mulf %1, %2 : vector<128x256xf32>
    %cst = arith.constant 4.471500e-02 : f32
    %4 = vector.broadcast %cst : f32 to vector<128x256xf32>
    %5 = arith.mulf %4, %3 : vector<128x256xf32>
    %6 = arith.addf %1, %5 : vector<128x256xf32>
    %cst_2 = arith.constant 0.797884583 : f32
    %7 = vector.broadcast %cst_2 : f32 to vector<128x256xf32>
    %8 = arith.mulf %7, %6 : vector<128x256xf32>
    %9 = math.tanh %8 : vector<128x256xf32>
    %cst_3 = arith.constant 1.000000e+00 : f32
    %10 = vector.broadcast %cst_3 : f32 to vector<128x256xf32>
    %11 = arith.addf %10, %9 : vector<128x256xf32>
    %cst_4 = arith.constant 5.000000e-01 : f32
    %12 = vector.broadcast %cst_4 : f32 to vector<128x256xf32>
    %13 = arith.mulf %12, %11 : vector<128x256xf32>
    %14 = arith.mulf %1, %13 : vector<128x256xf32>
    %c0_5 = arith.constant 0 : index
    %c0_6 = arith.constant 0 : index
    %15 = vector.load %arg3[%c0_5, %c0_6] : memref<256x128xbf16, #tpu.memory_space<vmem>>, vector<256x128xbf16>
    %16 = arith.truncf %14 : vector<128x256xf32> to vector<128x256xbf16>
    %cst_7 = arith.constant dense<0.000000e+00> : vector<256x256xf32>
    %17 = tpu.matmul %15, %16, %cst_7 {dimension_numbers = #tpu.dot_dimension_numbers<[1], [0], [0], [1], [0, 0, 1, 1], [], []>} : vector<256x128xbf16>, vector<128x256xbf16>, vector<256x256xf32> -> vector<256x256xf32>
    %c0_8 = arith.constant 0 : index
    %c0_9 = arith.constant 0 : index
    %18 = vector.load %arg4[%c0_8, %c0_9] : memref<256x1xf32, #tpu.memory_space<vmem>>, vector<256x1xf32>
    %19 = vector.broadcast %18 : vector<256x1xf32> to vector<256x256xf32>
    %20 = arith.addf %17, %19 : vector<256x256xf32>
    %21 = vector.extract_strided_slice %20 {offsets = [0, 0], sizes = [128, 256], strides = [1, 1]} : vector<256x256xf32> to vector<128x256xf32>
    %22 = vector.extract_strided_slice %20 {offsets = [128, 0], sizes = [128, 256], strides = [1, 1]} : vector<256x256xf32> to vector<128x256xf32>
    %23 = arith.negf %22 : vector<128x256xf32>
    %24 = math.exp %23 : vector<128x256xf32>
    %cst_10 = arith.constant 1.000000e+00 : f32
    %25 = vector.broadcast %cst_10 : f32 to vector<128x256xf32>
    %26 = arith.addf %25, %24 : vector<128x256xf32>
    %27 = arith.divf %25, %26 : vector<128x256xf32>
    %28 = arith.mulf %21, %27 : vector<128x256xf32>
    %c0_11 = arith.constant 0 : index
    %c0_12 = arith.constant 0 : index
    %c0_13 = arith.constant 0 : index
    %29 = vector.load %arg5[%c0_11, %c0_12, %c0_13] : memref<1x128x256xf32, #tpu.memory_space<vmem>>, vector<1x128x256xf32>
    %30 = vector.shape_cast %29 : vector<1x128x256xf32> to vector<128x256xf32>
    %31 = vector.shape_cast %28 : vector<128x256xf32> to vector<1x128x256xf32>
    tpu.vector_store %arg5[%c0_11, %c0_12, %c0_13], %31 {strides = array<i32>} : memref<1x128x256xf32, #tpu.memory_space<vmem>>, vector<1x128x256xf32>,
    return
  }
  func.func @transform_0(%arg0: i32, %arg1: i32) -> (i32, i32, i32) {
    %c0_i32 = arith.constant 0 : i32
    %c0_i32_0 = arith.constant 0 : i32
    return %arg0, %c0_i32, %arg1 : i32, i32, i32
  }
  func.func @transform_1(%arg0: i32, %arg1: i32) -> (i32, i32) {
    %c0_i32 = arith.constant 0 : i32
    %c0_i32_0 = arith.constant 0 : i32
    %c0_i32_1 = arith.constant 0 : i32
    return %c0_i32, %c0_i32_0 : i32, i32
  }
  func.func @transform_2(%arg0: i32, %arg1: i32) -> (i32, i32) {
    %c0_i32 = arith.constant 0 : i32
    %c0_i32_0 = arith.constant 0 : i32
    %c0_i32_1 = arith.constant 0 : i32
    return %c0_i32, %c0_i32_0 : i32, i32
  }
  func.func @transform_3(%arg0: i32, %arg1: i32) -> (i32, i32, i32) {
    %c0_i32 = arith.constant 0 : i32
    %c0_i32_0 = arith.constant 0 : i32
    return %arg0, %c0_i32, %arg1 : i32, i32, i32
  }
}

</mosaic_0001>

<llo_original>
// kernel: reverse.0
$region0: #{reverse.0}
  %s0 = inlined_call_operand.vmem [shape: f32[2,128,511], index: 0, kind: input, shape index: {}]
  %s1 = inlined_call_operand.vmem [shape: f32[2,128,511], index: 1, kind: output, shape index: {}]
  $region1: #{reverse.0} parent=0
    #allocation0 [shape = 'u8[139264]{0}', space=vmem, size = 0x22000, scoped, tag = 'operand span for operand 0']
    #allocation1 [shape = 'u8[131072]{0}', space=vmem, size = 0x20000, scoped, tag = 'operand span for operand 1']
    loop: start=0, step=1, limit=10
    $region2: #{reverse.0} parent=1 // loop_pre_header
      _
    $region3: #{reverse.0} parent=1 // loop_header
      %s3 = sphi 0, %s7
      %p4 = scmp.ge.s32.totalorder %s3, 10
      %s10 = sphi 0, %s29
      %s11 = sphi 0, %s25
      %s12 = sphi 0, %s21
      %s13 = sphi 0, %s10
      %s14 = sphi 0, %s11
      %s15 = sphi 0, %s12
      %s16 = sphi 0, %s13
      %s17 = sphi 0, %s14
      %s18 = sphi 0, %s15
    $region4: #{reverse.0} parent=1 // loop_header_branch
      %6 = sbr.rel (%p4) target = $region8
    $region5: #{reverse.0} parent=1 // loop_body
      %s8 = ssub.s32 %s3, 1
      %s9 = ssub.s32 %s3, 2
      %s19 = sadd.s32 1, %s12
      %p20 = scmp.ge.s32.totalorder %s19, 1
      %s21 = scalar_select %p20, 0, %s19
      %s22 = sadd.s32 1, %s11
      %s23 = scalar_select %p20, %s22, %s11
      %p24 = scmp.ge.s32.totalorder %s23, 4
      %s25 = scalar_select %p24, 0, %s23
      %s26 = sadd.s32 1, %s10
      %s27 = scalar_select %p24, %s26, %s10
      %p28 = scmp.ge.s32.totalorder %s27, 2
      %s29 = scalar_select %p28, 0, %s27
      %p30 = scmp.le.s32.totalorder 1, %s3
      %p31 = scmp.lt.s32.totalorder %s3, 9
      %p32 = pnand %p30, %p31
      %p33 = pneg %p32
      // Predicated region
      $region9: #{reverse.0} parent=5 // pred_check
        _
      $region10: #{reverse.0} parent=5 // pred_check_branch
        %35 = sbr.rel (%p32) target = $region12
      $region11: #{reverse.0} parent=5 // pred_region
        %s36 = ssub.s32 %s3, 1
      $region12: #{reverse.0} parent=5 // pred_fallthru
        _
      %p37 = scmp.lt.s32.totalorder %s3, 8
      // Predicated region
      $region13: #{reverse.0} parent=5 // pred_check
        %p38 = pneg %p37
      $region14: #{reverse.0} parent=5 // pred_check_branch
        %40 = sbr.rel (%p38) target = $region16
      $region15: #{reverse.0} parent=5 // pred_region
        %s41 = sand.u32 %s3, 1
        %s42 = sand.u32 %s3, 1
        %s43 = smul.addr %s42, 136
        %s44 = scalar_lea.vmem [#allocation0], %s43
        %s45 = ssub.s32 3, %s11
        %s46 = smul.u32 16, %s45
        %s47 = ssub.s32 1, %s46
        %p48 = scmp.gt.s32.totalorder %s47, 0
        %s49 = scalar_select %p48, %s47, 0
        %s50 = ssub.s32 17, %s49
        %s51 = smul.u32 128, %s50
        %p52 = scmp.ne.s32.totalorder 0, %s51
        %s53 = sadd.s32 %s46, %s49
        %s54 = ssub.s32 %s53, 1
        %s55 = sadd.s32 %s12, %s54
        %s56 = smul.addr %s10, 64
        %s57 = sadd.s32 %s55, %s56
        %s58 = smul.addr %s57, 8
        %s59 = scalar_lea.vmem %s0, %s58
        %s60 = smul.addr %s49, 8
        %s61 = scalar_lea.vmem %s44, %s60 [#allocation0]
        %s62 = ssub.s32 17, %s49
        // Predicated region
        $region17: #{reverse.0} parent=15 // pred_check
          %p63 = pneg %p52
        $region18: #{reverse.0} parent=15 // pred_check_branch
          %65 = sbr.rel (%p63) target = $region20
        $region19: #{reverse.0} parent=15 // pred_region
          // Predicated region
          $region21: #{reverse.0} parent=19 // pred_check
            _
          $region22: #{reverse.0} parent=19 // pred_check_branch
            %67 = sbr.rel (0) target = $region24
          $region23: #{reverse.0} parent=19 // pred_region
            // Predicated region
            $region43: #{reverse.0} parent=23 // pred_check
              _
            $region44: #{reverse.0} parent=23 // pred_check_branch
              %150 = sbr.rel (0) target = $region46
            $region45: #{reverse.0} parent=23 // pred_region
              %s151 = sdiv.u32.pop %s62, 17
              %s152 = srem.u32.pop %s62, 17
              // While loop
              $region47: #{reverse.0} parent=45 // loop_pre_header
                _
              $region48: #{reverse.0} parent=45 // loop_header
                %s154 = sphi 0, %s156
                %p155 = scmp.ge.s32.totalorder %s154, %s151
                %s159 = sphi 0, %s198
                %s160 = sphi %s59, %s201
                %s161 = sphi %s61, %s202
              $region49: #{reverse.0} parent=45 // loop_header_branch
                %158 = sbr.rel (%p155) target = $region53
              $region50: #{reverse.0} parent=45 // loop_body
                %v162 = vld [vmem:[%s160] sm:$0xff]
                %163 = vst [vmem:[%s161] sm:$0xff] %v162
                %v164 = vld [vmem:[%s160 + $0x8] sm:$0xff]
                %165 = vst [vmem:[%s161 + $0x8] sm:$0xff] %v164
                %v166 = vld [vmem:[%s160 + $0x10] sm:$0xff]
                %167 = vst [vmem:[%s161 + $0x10] sm:$0xff] %v166
                %v168 = vld [vmem:[%s160 + $0x18] sm:$0xff]
                %169 = vst [vmem:[%s161 + $0x18] sm:$0xff] %v168
                %v170 = vld [vmem:[%s160 + $0x20] sm:$0xff]
                %171 = vst [vmem:[%s161 + $0x20] sm:$0xff] %v170
                %v172 = vld [vmem:[%s160 + $0x28] sm:$0xff]
                %173 = vst [vmem:[%s161 + $0x28] sm:$0xff] %v172
                %v174 = vld [vmem:[%s160 + $0x30] sm:$0xff]
                %175 = vst [vmem:[%s161 + $0x30] sm:$0xff] %v174
                %v176 = vld [vmem:[%s160 + $0x38] sm:$0xff]
                %177 = vst [vmem:[%s161 + $0x38] sm:$0xff] %v176
                %v178 = vld [vmem:[%s160 + $0x40] sm:$0xff]
                %179 = vst [vmem:[%s161 + $0x40] sm:$0xff] %v178
                %v180 = vld [vmem:[%s160 + $0x48] sm:$0xff]
                %181 = vst [vmem:[%s161 + $0x48] sm:$0xff] %v180
                %v182 = vld [vmem:[%s160 + $0x50] sm:$0xff]
                %183 = vst [vmem:[%s161 + $0x50] sm:$0xff] %v182
                %v184 = vld [vmem:[%s160 + $0x58] sm:$0xff]
                %185 = vst [vmem:[%s161 + $0x58] sm:$0xff] %v184
                %v186 = vld [vmem:[%s160 + $0x60] sm:$0xff]
                %187 = vst [vmem:[%s161 + $0x60] sm:$0xff] %v186
                %v188 = vld [vmem:[%s160 + $0x68] sm:$0xff]
                %189 = vst [vmem:[%s161 + $0x68] sm:$0xff] %v188
                %v190 = vld [vmem:[%s160 + $0x70] sm:$0xff]
                %191 = vst [vmem:[%s161 + $0x70] sm:$0xff] %v190
                %v192 = vld [vmem:[%s160 + $0x78] sm:$0xff]
                %193 = vst [vmem:[%s161 + $0x78] sm:$0xff] %v192
                %v194 = vld [vmem:[%s160 + $0x80] sm:$0xff]
                %195 = vst [vmem:[%s161 + $0x80] sm:$0xff] %v194
                %s196 = sadd.s32 1, %s159
                %p197 = scmp.ge.s32.totalorder %s196, %s151
                %s198 = scalar_select %p197, 0, %s196
                %s199 = smul.u32 %s198, 136
                %s200 = smul.u32 %s198, 136
                %s201 = scalar_lea.vmem %s59, %s199
                %s202 = scalar_lea.vmem %s61, %s200 [#allocation0]
              $region51: #{reverse.0} parent=45 // loop_footer
                %s156 = sadd.s32 %s154, 1
              $region52: #{reverse.0} parent=45 // loop_footer_branch
                %153 = sbr.rel target = $region48
              $region53: #{reverse.0} parent=45 // loop_exit
                _
              %s203 = sdiv.u32.pop %s62, 17
              %s204 = srem.u32.pop %s62, 17
              %s205 = smul.u32 %s203, 17
              %s206 = smul.u32 8, %s205
              %s207 = scalar_lea.vmem %s59, %s206
              %s208 = smul.u32 8, %s205
              %s209 = scalar_lea.vmem %s61, %s208 [#allocation0]
              // While loop
              $region54: #{reverse.0} parent=45 // loop_pre_header
                _
              $region55: #{reverse.0} parent=45 // loop_header
                %s211 = sphi 0, %s213
                %p212 = scmp.ge.s32.totalorder %s211, %s204
                %s216 = sphi 0, %s223
                %s217 = sphi %s207, %s226
                %s218 = sphi %s209, %s227
              $region56: #{reverse.0} parent=45 // loop_header_branch
                %215 = sbr.rel (%p212) target = $region60
              $region57: #{reverse.0} parent=45 // loop_body
                %v219 = vld [vmem:[%s217] sm:$0xff]
                %220 = vst [vmem:[%s218] sm:$0xff] %v219
                %s221 = sadd.s32 1, %s216
                %p222 = scmp.ge.s32.totalorder %s221, %s204
                %s223 = scalar_select %p222, 0, %s221
                %s224 = smul.u32 %s223, 8
                %s225 = smul.u32 %s223, 8
                %s226 = scalar_lea.vmem %s207, %s224
                %s227 = scalar_lea.vmem %s209, %s225 [#allocation0]
              $region58: #{reverse.0} parent=45 // loop_footer
                %s213 = sadd.s32 %s211, 1
              $region59: #{reverse.0} parent=45 // loop_footer_branch
                %210 = sbr.rel target = $region55
              $region60: #{reverse.0} parent=45 // loop_exit
                _
            $region46: #{reverse.0} parent=23 // pred_fallthru
              _
            // Predicated region
            $region61: #{reverse.0} parent=23 // pred_check
              _
            $region62: #{reverse.0} parent=23 // pred_check_branch
              %229 = sbr.rel target = $region64
            $region63: #{reverse.0} parent=23 // pred_region
              _
            $region64: #{reverse.0} parent=23 // pred_fallthru
              _
          $region24: #{reverse.0} parent=19 // pred_fallthru
            _
          // Predicated region
          $region25: #{reverse.0} parent=19 // pred_check
            _
          $region26: #{reverse.0} parent=19 // pred_check_branch
            %69 = sbr.rel target = $region28
          $region27: #{reverse.0} parent=19 // pred_region
            %s71 = ssub.s32 256, 1
            %s72 = sdiv.u32.pop %s62, 17
            %s73 = srem.u32.pop %s62, 17
            // While loop
            $region29: #{reverse.0} parent=27 // loop_pre_header
              _
            $region30: #{reverse.0} parent=27 // loop_header
              %s75 = sphi 0, %s77
              %p76 = scmp.ge.s32.totalorder %s75, %s72
              %s80 = sphi 0, %s119
              %s81 = sphi %s59, %s122
              %s82 = sphi %s61, %s123
            $region31: #{reverse.0} parent=27 // loop_header_branch
              %79 = sbr.rel (%p76) target = $region35
            $region32: #{reverse.0} parent=27 // loop_body
              %v83 = vld [vmem:[%s81] sm:%s71]
              %84 = vst [vmem:[%s82] sm:%s71] %v83
              %v85 = vld [vmem:[%s81 + $0x8] sm:%s71]
              %86 = vst [vmem:[%s82 + $0x8] sm:%s71] %v85
              %v87 = vld [vmem:[%s81 + $0x10] sm:%s71]
              %88 = vst [vmem:[%s82 + $0x10] sm:%s71] %v87
              %v89 = vld [vmem:[%s81 + $0x18] sm:%s71]
              %90 = vst [vmem:[%s82 + $0x18] sm:%s71] %v89
              %v91 = vld [vmem:[%s81 + $0x20] sm:%s71]
              %92 = vst [vmem:[%s82 + $0x20] sm:%s71] %v91
              %v93 = vld [vmem:[%s81 + $0x28] sm:%s71]
              %94 = vst [vmem:[%s82 + $0x28] sm:%s71] %v93
              %v95 = vld [vmem:[%s81 + $0x30] sm:%s71]
              %96 = vst [vmem:[%s82 + $0x30] sm:%s71] %v95
              %v97 = vld [vmem:[%s81 + $0x38] sm:%s71]
              %98 = vst [vmem:[%s82 + $0x38] sm:%s71] %v97
              %v99 = vld [vmem:[%s81 + $0x40] sm:%s71]
              %100 = vst [vmem:[%s82 + $0x40] sm:%s71] %v99
              %v101 = vld [vmem:[%s81 + $0x48] sm:%s71]
              %102 = vst [vmem:[%s82 + $0x48] sm:%s71] %v101
              %v103 = vld [vmem:[%s81 + $0x50] sm:%s71]
              %104 = vst [vmem:[%s82 + $0x50] sm:%s71] %v103
              %v105 = vld [vmem:[%s81 + $0x58] sm:%s71]
              %106 = vst [vmem:[%s82 + $0x58] sm:%s71] %v105
              %v107 = vld [vmem:[%s81 + $0x60] sm:%s71]
              %108 = vst [vmem:[%s82 + $0x60] sm:%s71] %v107
              %v109 = vld [vmem:[%s81 + $0x68] sm:%s71]
              %110 = vst [vmem:[%s82 + $0x68] sm:%s71] %v109
              %v111 = vld [vmem:[%s81 + $0x70] sm:%s71]
              %112 = vst [vmem:[%s82 + $0x70] sm:%s71] %v111
              %v113 = vld [vmem:[%s81 + $0x78] sm:%s71]
              %114 = vst [vmem:[%s82 + $0x78] sm:%s71] %v113
              %v115 = vld [vmem:[%s81 + $0x80] sm:%s71]
              %116 = vst [vmem:[%s82 + $0x80] sm:%s71] %v115
              %s117 = sadd.s32 1, %s80
              %p118 = scmp.ge.s32.totalorder %s117, %s72
              %s119 = scalar_select %p118, 0, %s117
              %s120 = smul.u32 %s119, 136
              %s121 = smul.u32 %s119, 136
              %s122 = scalar_lea.vmem %s59, %s120
              %s123 = scalar_lea.vmem %s61, %s121 [#allocation0]
            $region33: #{reverse.0} parent=27 // loop_footer
              %s77 = sadd.s32 %s75, 1
            $region34: #{reverse.0} parent=27 // loop_footer_branch
              %74 = sbr.rel target = $region30
            $region35: #{reverse.0} parent=27 // loop_exit
              _
            %s124 = sdiv.u32.pop %s62, 17
            %s125 = srem.u32.pop %s62, 17
            %s126 = smul.u32 %s124, 17
            %s127 = smul.u32 8, %s126
            %s128 = scalar_lea.vmem %s59, %s127
            %s129 = smul.u32 8, %s126
            %s130 = scalar_lea.vmem %s61, %s129 [#allocation0]
            // While loop
            $region36: #{reverse.0} parent=27 // loop_pre_header
              _
            $region37: #{reverse.0} parent=27 // loop_header
              %s132 = sphi 0, %s134
              %p133 = scmp.ge.s32.totalorder %s132, %s125
              %s137 = sphi 0, %s144
              %s138 = sphi %s128, %s147
              %s139 = sphi %s130, %s148
            $region38: #{reverse.0} parent=27 // loop_header_branch
              %136 = sbr.rel (%p133) target = $region42
            $region39: #{reverse.0} parent=27 // loop_body
              %v140 = vld [vmem:[%s138] sm:%s71]
              %141 = vst [vmem:[%s139] sm:%s71] %v140
              %s142 = sadd.s32 1, %s137
              %p143 = scmp.ge.s32.totalorder %s142, %s125
              %s144 = scalar_select %p143, 0, %s142
              %s145 = smul.u32 %s144, 8
              %s146 = smul.u32 %s144, 8
              %s147 = scalar_lea.vmem %s128, %s145
              %s148 = scalar_lea.vmem %s130, %s146 [#allocation0]
            $region40: #{reverse.0} parent=27 // loop_footer
              %s134 = sadd.s32 %s132, 1
            $region41: #{reverse.0} parent=27 // loop_footer_branch
              %131 = sbr.rel target = $region37
            $region42: #{reverse.0} parent=27 // loop_exit
              _
          $region28: #{reverse.0} parent=19 // pred_fallthru
            _
        $region20: #{reverse.0} parent=15 // pred_fallthru
          _
        %230 = vnop
      $region16: #{reverse.0} parent=5 // pred_fallthru
        _
      %p231 = scmp.le.s32.totalorder 1, %s3
      %p232 = scmp.lt.s32.totalorder %s3, 9
      %p233 = pnand %p231, %p232
      %p234 = pneg %p233
      // Predicated region
      $region65: #{reverse.0} parent=5 // pred_check
        _
      $region66: #{reverse.0} parent=5 // pred_check_branch
        %236 = sbr.rel (%p233) target = $region68
      $region67: #{reverse.0} parent=5 // pred_region
        %s237 = ssub.s32 %s3, 1
        %s238 = sand.u32 %s8, 1
        %s239 = sand.u32 %s8, 1
        %s240 = smul.addr %s239, 136
        %s241 = scalar_lea.vmem [#allocation0], %s240
        %s242 = sand.u32 %s8, 1
        %s243 = sand.u32 %s8, 1
        %s244 = smul.addr %s243, 136
        %s245 = scalar_lea.vmem [#allocation0], %s244
        %s246 = sand.u32 %s8, 1
        %s247 = sand.u32 %s8, 1
        %s248 = smul.addr %s247, 128
        %s249 = scalar_lea.vmem [#allocation1], %s248
        %s250 = ssub.s32 3, %s14
        %s251 = smul.u32 16, %s250
        %s252 = ssub.s32 1, %s251
        %p253 = scmp.gt.s32.totalorder %s252, 0
        %s254 = scalar_select %p253, %s252, 0
        %s255 = ssub.s32 17, %s254
        %s256 = smul.u32 128, %s255
        %s257 = smul.u32 16, %s14
        %s258 = scalar_lea.vmem %s241, 120 [#allocation0]
        %s259 = scalar_lea.vmem %s258, 7 [#allocation0]
        %v260 = vld [vmem:[%s259] ss:$-1 sm:$0xff]
        %v261 = vrot.slane %v260, 1
        %262 = vst [vmem:[%s249] sm:$0xff] %v261
        %s263 = scalar_lea.vmem %s241, 128 [#allocation0]
        %s264 = scalar_lea.vmem %s263, 7 [#allocation0]
        %v265 = vld [vmem:[%s264] ss:$-1 sm:$0xff]
        %v266 = vrot.slane %v265, 1
        %v267 = vlaneseq
        %v268 = vshrl.u32 %v267, 7
        %vm269 = vcmp.lt.s32.totalorder %v268, 7
        %270 = vst.msk [vmem:[%s249] sm:$0xff] %vm269, %v266
        %s271 = scalar_lea.vmem %s249, 8 [#allocation1]
        %s272 = scalar_lea.vmem %s241, 112 [#allocation0]
        %s273 = scalar_lea.vmem %s272, 7 [#allocation0]
        %v274 = vld [vmem:[%s273] ss:$-1 sm:$0xff]
        %v275 = vrot.slane %v274, 1
        %276 = vst [vmem:[%s271] sm:$0xff] %v275
        %s277 = scalar_lea.vmem %s241, 120 [#allocation0]
        %s278 = scalar_lea.vmem %s277, 7 [#allocation0]
        %v279 = vld [vmem:[%s278] ss:$-1 sm:$0xff]
        %v280 = vrot.slane %v279, 1
        %v281 = vlaneseq
        %v282 = vshrl.u32 %v281, 7
        %vm283 = vcmp.lt.s32.totalorder %v282, 7
        %284 = vst.msk [vmem:[%s271] sm:$0xff] %vm283, %v280
        %s285 = scalar_lea.vmem %s249, 16 [#allocation1]
        %s286 = scalar_lea.vmem %s241, 104 [#allocation0]
        %s287 = scalar_lea.vmem %s286, 7 [#allocation0]
        %v288 = vld [vmem:[%s287] ss:$-1 sm:$0xff]
        %v289 = vrot.slane %v288, 1
        %290 = vst [vmem:[%s285] sm:$0xff] %v289
        %s291 = scalar_lea.vmem %s241, 112 [#allocation0]
        %s292 = scalar_lea.vmem %s291, 7 [#allocation0]
        %v293 = vld [vmem:[%s292] ss:$-1 sm:$0xff]
        %v294 = vrot.slane %v293, 1
        %v295 = vlaneseq
        %v296 = vshrl.u32 %v295, 7
        %vm297 = vcmp.lt.s32.totalorder %v296, 7
        %298 = vst.msk [vmem:[%s285] sm:$0xff] %vm297, %v294
        %s299 = scalar_lea.vmem %s249, 24 [#allocation1]
        %s300 = scalar_lea.vmem %s241, 96 [#allocation0]
        %s301 = scalar_lea.vmem %s300, 7 [#allocation0]
        %v302 = vld [vmem:[%s301] ss:$-1 sm:$0xff]
        %v303 = vrot.slane %v302, 1
        %304 = vst [vmem:[%s299] sm:$0xff] %v303
        %s305 = scalar_lea.vmem %s241, 104 [#allocation0]
        %s306 = scalar_lea.vmem %s305, 7 [#allocation0]
        %v307 = vld [vmem:[%s306] ss:$-1 sm:$0xff]
        %v308 = vrot.slane %v307, 1
        %v309 = vlaneseq
        %v310 = vshrl.u32 %v309, 7
        %vm311 = vcmp.lt.s32.totalorder %v310, 7
        %312 = vst.msk [vmem:[%s299] sm:$0xff] %vm311, %v308
        %s313 = scalar_lea.vmem %s249, 32 [#allocation1]
        %s314 = scalar_lea.vmem %s241, 88 [#allocation0]
        %s315 = scalar_lea.vmem %s314, 7 [#allocation0]
        %v316 = vld [vmem:[%s315] ss:$-1 sm:$0xff]
        %v317 = vrot.slane %v316, 1
        %318 = vst [vmem:[%s313] sm:$0xff] %v317
        %s319 = scalar_lea.vmem %s241, 96 [#allocation0]
        %s320 = scalar_lea.vmem %s319, 7 [#allocation0]
        %v321 = vld [vmem:[%s320] ss:$-1 sm:$0xff]
        %v322 = vrot.slane %v321, 1
        %v323 = vlaneseq
        %v324 = vshrl.u32 %v323, 7
        %vm325 = vcmp.lt.s32.totalorder %v324, 7
        %326 = vst.msk [vmem:[%s313] sm:$0xff] %vm325, %v322
        %s327 = scalar_lea.vmem %s249, 40 [#allocation1]
        %s328 = scalar_lea.vmem %s241, 80 [#allocation0]
        %s329 = scalar_lea.vmem %s328, 7 [#allocation0]
        %v330 = vld [vmem:[%s329] ss:$-1 sm:$0xff]
        %v331 = vrot.slane %v330, 1
        %332 = vst [vmem:[%s327] sm:$0xff] %v331
        %s333 = scalar_lea.vmem %s241, 88 [#allocation0]
        %s334 = scalar_lea.vmem %s333, 7 [#allocation0]
        %v335 = vld [vmem:[%s334] ss:$-1 sm:$0xff]
        %v336 = vrot.slane %v335, 1
        %v337 = vlaneseq
        %v338 = vshrl.u32 %v337, 7
        %vm339 = vcmp.lt.s32.totalorder %v338, 7
        %340 = vst.msk [vmem:[%s327] sm:$0xff] %vm339, %v336
        %s341 = scalar_lea.vmem %s249, 48 [#allocation1]
        %s342 = scalar_lea.vmem %s241, 72 [#allocation0]
        %s343 = scalar_lea.vmem %s342, 7 [#allocation0]
        %v344 = vld [vmem:[%s343] ss:$-1 sm:$0xff]
        %v345 = vrot.slane %v344, 1
        %346 = vst [vmem:[%s341] sm:$0xff] %v345
        %s347 = scalar_lea.vmem %s241, 80 [#allocation0]
        %s348 = scalar_lea.vmem %s347, 7 [#allocation0]
        %v349 = vld [vmem:[%s348] ss:$-1 sm:$0xff]
        %v350 = vrot.slane %v349, 1
        %v351 = vlaneseq
        %v352 = vshrl.u32 %v351, 7
        %vm353 = vcmp.lt.s32.totalorder %v352, 7
        %354 = vst.msk [vmem:[%s341] sm:$0xff] %vm353, %v350
        %s355 = scalar_lea.vmem %s249, 56 [#allocation1]
        %s356 = scalar_lea.vmem %s241, 64 [#allocation0]
        %s357 = scalar_lea.vmem %s356, 7 [#allocation0]
        %v358 = vld [vmem:[%s357] ss:$-1 sm:$0xff]
        %v359 = vrot.slane %v358, 1
        %360 = vst [vmem:[%s355] sm:$0xff] %v359
        %s361 = scalar_lea.vmem %s241, 72 [#allocation0]
        %s362 = scalar_lea.vmem %s361, 7 [#allocation0]
        %v363 = vld [vmem:[%s362] ss:$-1 sm:$0xff]
        %v364 = vrot.slane %v363, 1
        %v365 = vlaneseq
        %v366 = vshrl.u32 %v365, 7
        %vm367 = vcmp.lt.s32.totalorder %v366, 7
        %368 = vst.msk [vmem:[%s355] sm:$0xff] %vm367, %v364
        %s369 = scalar_lea.vmem %s249, 64 [#allocation1]
        %s370 = scalar_lea.vmem %s241, 56 [#allocation0]
        %s371 = scalar_lea.vmem %s370, 7 [#allocation0]
        %v372 = vld [vmem:[%s371] ss:$-1 sm:$0xff]
        %v373 = vrot.slane %v372, 1
        %374 = vst [vmem:[%s369] sm:$0xff] %v373
        %s375 = scalar_lea.vmem %s241, 64 [#allocation0]
        %s376 = scalar_lea.vmem %s375, 7 [#allocation0]
        %v377 = vld [vmem:[%s376] ss:$-1 sm:$0xff]
        %v378 = vrot.slane %v377, 1
        %v379 = vlaneseq
        %v380 = vshrl.u32 %v379, 7
        %vm381 = vcmp.lt.s32.totalorder %v380, 7
        %382 = vst.msk [vmem:[%s369] sm:$0xff] %vm381, %v378
        %s383 = scalar_lea.vmem %s249, 72 [#allocation1]
        %s384 = scalar_lea.vmem %s241, 48 [#allocation0]
        %s385 = scalar_lea.vmem %s384, 7 [#allocation0]
        %v386 = vld [vmem:[%s385] ss:$-1 sm:$0xff]
        %v387 = vrot.slane %v386, 1
        %388 = vst [vmem:[%s383] sm:$0xff] %v387
        %s389 = scalar_lea.vmem %s241, 56 [#allocation0]
        %s390 = scalar_lea.vmem %s389, 7 [#allocation0]
        %v391 = vld [vmem:[%s390] ss:$-1 sm:$0xff]
        %v392 = vrot.slane %v391, 1
        %v393 = vlaneseq
        %v394 = vshrl.u32 %v393, 7
        %vm395 = vcmp.lt.s32.totalorder %v394, 7
        %396 = vst.msk [vmem:[%s383] sm:$0xff] %vm395, %v392
        %s397 = scalar_lea.vmem %s249, 80 [#allocation1]
        %s398 = scalar_lea.vmem %s241, 40 [#allocation0]
        %s399 = scalar_lea.vmem %s398, 7 [#allocation0]
        %v400 = vld [vmem:[%s399] ss:$-1 sm:$0xff]
        %v401 = vrot.slane %v400, 1
        %402 = vst [vmem:[%s397] sm:$0xff] %v401
        %s403 = scalar_lea.vmem %s241, 48 [#allocation0]
        %s404 = scalar_lea.vmem %s403, 7 [#allocation0]
        %v405 = vld [vmem:[%s404] ss:$-1 sm:$0xff]
        %v406 = vrot.slane %v405, 1
        %v407 = vlaneseq
        %v408 = vshrl.u32 %v407, 7
        %vm409 = vcmp.lt.s32.totalorder %v408, 7
        %410 = vst.msk [vmem:[%s397] sm:$0xff] %vm409, %v406
        %s411 = scalar_lea.vmem %s249, 88 [#allocation1]
        %s412 = scalar_lea.vmem %s241, 32 [#allocation0]
        %s413 = scalar_lea.vmem %s412, 7 [#allocation0]
        %v414 = vld [vmem:[%s413] ss:$-1 sm:$0xff]
        %v415 = vrot.slane %v414, 1
        %416 = vst [vmem:[%s411] sm:$0xff] %v415
        %s417 = scalar_lea.vmem %s241, 40 [#allocation0]
        %s418 = scalar_lea.vmem %s417, 7 [#allocation0]
        %v419 = vld [vmem:[%s418] ss:$-1 sm:$0xff]
        %v420 = vrot.slane %v419, 1
        %v421 = vlaneseq
        %v422 = vshrl.u32 %v421, 7
        %vm423 = vcmp.lt.s32.totalorder %v422, 7
        %424 = vst.msk [vmem:[%s411] sm:$0xff] %vm423, %v420
        %s425 = scalar_lea.vmem %s249, 96 [#allocation1]
        %s426 = scalar_lea.vmem %s241, 24 [#allocation0]
        %s427 = scalar_lea.vmem %s426, 7 [#allocation0]
        %v428 = vld [vmem:[%s427] ss:$-1 sm:$0xff]
        %v429 = vrot.slane %v428, 1
        %430 = vst [vmem:[%s425] sm:$0xff] %v429
        %s431 = scalar_lea.vmem %s241, 32 [#allocation0]
        %s432 = scalar_lea.vmem %s431, 7 [#allocation0]
        %v433 = vld [vmem:[%s432] ss:$-1 sm:$0xff]
        %v434 = vrot.slane %v433, 1
        %v435 = vlaneseq
        %v436 = vshrl.u32 %v435, 7
        %vm437 = vcmp.lt.s32.totalorder %v436, 7
        %438 = vst.msk [vmem:[%s425] sm:$0xff] %vm437, %v434
        %s439 = scalar_lea.vmem %s249, 104 [#allocation1]
        %s440 = scalar_lea.vmem %s241, 16 [#allocation0]
        %s441 = scalar_lea.vmem %s440, 7 [#allocation0]
        %v442 = vld [vmem:[%s441] ss:$-1 sm:$0xff]
        %v443 = vrot.slane %v442, 1
        %444 = vst [vmem:[%s439] sm:$0xff] %v443
        %s445 = scalar_lea.vmem %s241, 24 [#allocation0]
        %s446 = scalar_lea.vmem %s445, 7 [#allocation0]
        %v447 = vld [vmem:[%s446] ss:$-1 sm:$0xff]
        %v448 = vrot.slane %v447, 1
        %v449 = vlaneseq
        %v450 = vshrl.u32 %v449, 7
        %vm451 = vcmp.lt.s32.totalorder %v450, 7
        %452 = vst.msk [vmem:[%s439] sm:$0xff] %vm451, %v448
        %s453 = scalar_lea.vmem %s249, 112 [#allocation1]
        %s454 = scalar_lea.vmem %s241, 8 [#allocation0]
        %s455 = scalar_lea.vmem %s454, 7 [#allocation0]
        %v456 = vld [vmem:[%s455] ss:$-1 sm:$0xff]
        %v457 = vrot.slane %v456, 1
        %458 = vst [vmem:[%s453] sm:$0xff] %v457
        %s459 = scalar_lea.vmem %s241, 16 [#allocation0]
        %s460 = scalar_lea.vmem %s459, 7 [#allocation0]
        %v461 = vld [vmem:[%s460] ss:$-1 sm:$0xff]
        %v462 = vrot.slane %v461, 1
        %v463 = vlaneseq
        %v464 = vshrl.u32 %v463, 7
        %vm465 = vcmp.lt.s32.totalorder %v464, 7
        %466 = vst.msk [vmem:[%s453] sm:$0xff] %vm465, %v462
        %s467 = scalar_lea.vmem %s249, 120 [#allocation1]
        %s468 = scalar_lea.vmem %s241, 7 [#allocation0]
        %v469 = vld [vmem:[%s468] ss:$-1 sm:$0xff]
        %v470 = vrot.slane %v469, 1
        %471 = vst [vmem:[%s467] sm:$0xff] %v470
        %s472 = scalar_lea.vmem %s241, 8 [#allocation0]
        %s473 = scalar_lea.vmem %s472, 7 [#allocation0]
        %v474 = vld [vmem:[%s473] ss:$-1 sm:$0xff]
        %v475 = vrot.slane %v474, 1
        %v476 = vlaneseq
        %v477 = vshrl.u32 %v476, 7
        %vm478 = vcmp.lt.s32.totalorder %v477, 7
        %479 = vst.msk [vmem:[%s467] sm:$0xff] %vm478, %v475
        %s480 = sand.u32 %s8, 1
        %s481 = sand.u32 %s8, 1
        %s482 = smul.addr %s481, 128
        %s483 = scalar_lea.vmem [#allocation1], %s482
        %s484 = smul.u32 16, %s14
        %s485 = sadd.s32 %s15, %s484
        %s486 = smul.addr %s13, 64
        %s487 = sadd.s32 %s485, %s486
        %s488 = smul.addr %s487, 8
        %s489 = scalar_lea.vmem %s1, %s488
        // Predicated region
        $region69: #{reverse.0} parent=67 // pred_check
          _
        $region70: #{reverse.0} parent=67 // pred_check_branch
          %491 = sbr.rel (0) target = $region72
        $region71: #{reverse.0} parent=67 // pred_region
          // Predicated region
          $region73: #{reverse.0} parent=71 // pred_check
            _
          $region74: #{reverse.0} parent=71 // pred_check_branch
            %493 = sbr.rel (0) target = $region76
          $region75: #{reverse.0} parent=71 // pred_region
            // Predicated region
            $region88: #{reverse.0} parent=75 // pred_check
              _
            $region89: #{reverse.0} parent=75 // pred_check_branch
              %539 = sbr.rel (0) target = $region91
            $region90: #{reverse.0} parent=75 // pred_region
              loop: start=0, step=1, limit=1
              $region92: #{reverse.0} parent=90 // loop_pre_header
                _
              $region93: #{reverse.0} parent=90 // loop_header
                %s541 = sphi 0, %s545
                %p542 = scmp.ge.s32.totalorder %s541, 1
                %s546 = sphi %s483, %s483
                %s547 = sphi %s489, %s489
              $region94: #{reverse.0} parent=90 // loop_header_branch
                %544 = sbr.rel (%p542) target = $region98
              $region95: #{reverse.0} parent=90 // loop_body
                %v548 = vld [vmem:[%s546] sm:$0xff]
                %549 = vst [vmem:[%s547] sm:$0xff] %v548
                %v550 = vld [vmem:[%s546 + $0x8] sm:$0xff]
                %551 = vst [vmem:[%s547 + $0x8] sm:$0xff] %v550
                %v552 = vld [vmem:[%s546 + $0x10] sm:$0xff]
                %553 = vst [vmem:[%s547 + $0x10] sm:$0xff] %v552
                %v554 = vld [vmem:[%s546 + $0x18] sm:$0xff]
                %555 = vst [vmem:[%s547 + $0x18] sm:$0xff] %v554
                %v556 = vld [vmem:[%s546 + $0x20] sm:$0xff]
                %557 = vst [vmem:[%s547 + $0x20] sm:$0xff] %v556
                %v558 = vld [vmem:[%s546 + $0x28] sm:$0xff]
                %559 = vst [vmem:[%s547 + $0x28] sm:$0xff] %v558
                %v560 = vld [vmem:[%s546 + $0x30] sm:$0xff]
                %561 = vst [vmem:[%s547 + $0x30] sm:$0xff] %v560
                %v562 = vld [vmem:[%s546 + $0x38] sm:$0xff]
                %563 = vst [vmem:[%s547 + $0x38] sm:$0xff] %v562
                %v564 = vld [vmem:[%s546 + $0x40] sm:$0xff]
                %565 = vst [vmem:[%s547 + $0x40] sm:$0xff] %v564
                %v566 = vld [vmem:[%s546 + $0x48] sm:$0xff]
                %567 = vst [vmem:[%s547 + $0x48] sm:$0xff] %v566
                %v568 = vld [vmem:[%s546 + $0x50] sm:$0xff]
                %569 = vst [vmem:[%s547 + $0x50] sm:$0xff] %v568
                %v570 = vld [vmem:[%s546 + $0x58] sm:$0xff]
                %571 = vst [vmem:[%s547 + $0x58] sm:$0xff] %v570
                %v572 = vld [vmem:[%s546 + $0x60] sm:$0xff]
                %573 = vst [vmem:[%s547 + $0x60] sm:$0xff] %v572
                %v574 = vld [vmem:[%s546 + $0x68] sm:$0xff]
                %575 = vst [vmem:[%s547 + $0x68] sm:$0xff] %v574
                %v576 = vld [vmem:[%s546 + $0x70] sm:$0xff]
                %577 = vst [vmem:[%s547 + $0x70] sm:$0xff] %v576
                %v578 = vld [vmem:[%s546 + $0x78] sm:$0xff]
                %579 = vst [vmem:[%s547 + $0x78] sm:$0xff] %v578
              $region96: #{reverse.0} parent=90 // loop_footer
                %s545 = sadd.s32 1, %s541
              $region97: #{reverse.0} parent=90 // loop_footer_branch
                %540 = sbr.rel target = $region93
              $region98: #{reverse.0} parent=90 // loop_exit
                _
            $region91: #{reverse.0} parent=75 // pred_fallthru
              _
            // Predicated region
            $region99: #{reverse.0} parent=75 // pred_check
              _
            $region100: #{reverse.0} parent=75 // pred_check_branch
              %581 = sbr.rel target = $region102
            $region101: #{reverse.0} parent=75 // pred_region
              _
            $region102: #{reverse.0} parent=75 // pred_fallthru
              _
          $region76: #{reverse.0} parent=71 // pred_fallthru
            _
          // Predicated region
          $region77: #{reverse.0} parent=71 // pred_check
            _
          $region78: #{reverse.0} parent=71 // pred_check_branch
            %495 = sbr.rel target = $region80
          $region79: #{reverse.0} parent=71 // pred_region
            %s497 = ssub.s32 256, 1
            loop: start=0, step=1, limit=1
            $region81: #{reverse.0} parent=79 // loop_pre_header
              _
            $region82: #{reverse.0} parent=79 // loop_header
              %s499 = sphi 0, %s503
              %p500 = scmp.ge.s32.totalorder %s499, 1
              %s504 = sphi %s483, %s483
              %s505 = sphi %s489, %s489
            $region83: #{reverse.0} parent=79 // loop_header_branch
              %502 = sbr.rel (%p500) target = $region87
            $region84: #{reverse.0} parent=79 // loop_body
              %v506 = vld [vmem:[%s504] sm:%s497]
              %507 = vst [vmem:[%s505] sm:%s497] %v506
              %v508 = vld [vmem:[%s504 + $0x8] sm:%s497]
              %509 = vst [vmem:[%s505 + $0x8] sm:%s497] %v508
              %v510 = vld [vmem:[%s504 + $0x10] sm:%s497]
              %511 = vst [vmem:[%s505 + $0x10] sm:%s497] %v510
              %v512 = vld [vmem:[%s504 + $0x18] sm:%s497]
              %513 = vst [vmem:[%s505 + $0x18] sm:%s497] %v512
              %v514 = vld [vmem:[%s504 + $0x20] sm:%s497]
              %515 = vst [vmem:[%s505 + $0x20] sm:%s497] %v514
              %v516 = vld [vmem:[%s504 + $0x28] sm:%s497]
              %517 = vst [vmem:[%s505 + $0x28] sm:%s497] %v516
              %v518 = vld [vmem:[%s504 + $0x30] sm:%s497]
              %519 = vst [vmem:[%s505 + $0x30] sm:%s497] %v518
              %v520 = vld [vmem:[%s504 + $0x38] sm:%s497]
              %521 = vst [vmem:[%s505 + $0x38] sm:%s497] %v520
              %v522 = vld [vmem:[%s504 + $0x40] sm:%s497]
              %523 = vst [vmem:[%s505 + $0x40] sm:%s497] %v522
              %v524 = vld [vmem:[%s504 + $0x48] sm:%s497]
              %525 = vst [vmem:[%s505 + $0x48] sm:%s497] %v524
              %v526 = vld [vmem:[%s504 + $0x50] sm:%s497]
              %527 = vst [vmem:[%s505 + $0x50] sm:%s497] %v526
              %v528 = vld [vmem:[%s504 + $0x58] sm:%s497]
              %529 = vst [vmem:[%s505 + $0x58] sm:%s497] %v528
              %v530 = vld [vmem:[%s504 + $0x60] sm:%s497]
              %531 = vst [vmem:[%s505 + $0x60] sm:%s497] %v530
              %v532 = vld [vmem:[%s504 + $0x68] sm:%s497]
              %533 = vst [vmem:[%s505 + $0x68] sm:%s497] %v532
              %v534 = vld [vmem:[%s504 + $0x70] sm:%s497]
              %535 = vst [vmem:[%s505 + $0x70] sm:%s497] %v534
              %v536 = vld [vmem:[%s504 + $0x78] sm:%s497]
              %537 = vst [vmem:[%s505 + $0x78] sm:%s497] %v536
            $region85: #{reverse.0} parent=79 // loop_footer
              %s503 = sadd.s32 1, %s499
            $region86: #{reverse.0} parent=79 // loop_footer_branch
              %498 = sbr.rel target = $region82
            $region87: #{reverse.0} parent=79 // loop_exit
              _
          $region80: #{reverse.0} parent=71 // pred_fallthru
            _
        $region72: #{reverse.0} parent=67 // pred_fallthru
          _
        %582 = vnop
      $region68: #{reverse.0} parent=5 // pred_fallthru
        _
      %p583 = scmp.le.s32.totalorder 2, %s3
      // Predicated region
      $region103: #{reverse.0} parent=5 // pred_check
        %p584 = pneg %p583
      $region104: #{reverse.0} parent=5 // pred_check_branch
        %586 = sbr.rel (%p584) target = $region106
      $region105: #{reverse.0} parent=5 // pred_region
        %s587 = ssub.s32 %s3, 2
        %s588 = sand.u32 %s9, 1
        %s589 = sand.u32 %s9, 1
        %s590 = smul.addr %s589, 128
        %s591 = scalar_lea.vmem [#allocation1], %s590
      $region106: #{reverse.0} parent=5 // pred_fallthru
        _
    $region6: #{reverse.0} parent=1 // loop_footer
      %s7 = sadd.s32 1, %s3
    $region7: #{reverse.0} parent=1 // loop_footer_branch
      %2 = sbr.rel target = $region3
    $region8: #{reverse.0} parent=1 // loop_exit
      _

// kernel: s4_block_forward.1
$region0: #{s4_block_forward.1}
  #allocation0 [shape = 'u32[]', space=smem, size = 0x4, offset = 0x4, fixed_abs, tag = 'smem constant byte address 0x4 - core index']
  #allocation1 [shape = 'u32[144,128]{1,0:T(1,128)}', space=vmem, size = 0x12000, scoped, tag = 'internal scratch']
  %s0 = inlined_call_operand.vmem [shape: f32[2,128,512], index: 0, kind: input, shape index: {}]
  %s1 = inlined_call_operand.vmem [shape: bf16[256,128], index: 1, kind: input, shape index: {}]
  %s2 = inlined_call_operand.vmem [shape: f32[256,1], index: 2, kind: input, shape index: {}]
  %s3 = inlined_call_operand.hbm [shape: f32[2,128,512], index: 3, kind: output, shape index: {}]
  %s4 = sld [smem:[#allocation0]]
  $region68: #{s4_block_forward.1} parent=0
    _
  %s6 = ssub.s32 1, %s4
  %s7 = scalar_select 0, %s6, %s4
  $region1: #{s4_block_forward.1} parent=0
    #allocation2 [shape = 'u8[262144]{0}', space=vmem, size = 0x40000, scoped, tag = 'input window, operand 0']
    #allocation3 [shape = 'u8[262144]{0}', space=vmem, size = 0x40000, scoped, tag = 'output window, operand 0']
    #allocation4 [shape = 's32[2]{0}', space=sflag, size = 0x8, scoped, tag = 'scoped memory for s4_block_forward.1']
    %8 = vsyncpa [#allocation4], 0
    %s9 = scalar_lea.sflag [#allocation4], 1
    %10 = vsyncpa %s9, 0
    loop: start=0, step=1, limit=6
    $region2: #{s4_block_forward.1} parent=1 // loop_pre_header
      _
    $region3: #{s4_block_forward.1} parent=1 // loop_header
      %s12 = sphi 0, %s16
      %p13 = scmp.ge.s32.totalorder %s12, 6
      %s19 = sphi 0, %s31
      %s20 = sphi 0, %s27
      %s21 = sphi 0, %s19
      %s22 = sphi 0, %s20
      %s23 = sphi 0, %s21
      %s24 = sphi 0, %s22
      %s36 = sphi 0, %s38
      %s39 = sphi 0, %s36
      %s40 = sphi 0, %s39
      %s56 = sphi 0, %s40
      %s60 = sphi 0, %s60
      %s62 = sphi 0, %s60
      %s63 = sphi 0, %s62
      %s77 = sphi 0, %s63
      %s81 = sphi 0, %s81
      %s83 = sphi 0, %s81
      %s84 = sphi 0, %s83
      %s98 = sphi 0, %s84
      %s106 = sphi 0, %s108
      %s109 = sphi 0, %s106
      %s110 = sphi 0, %s109
      %s126 = sphi 0, %s110
    $region4: #{s4_block_forward.1} parent=1 // loop_header_branch
      %15 = sbr.rel (%p13) target = $region8
    $region5: #{s4_block_forward.1} parent=1 // loop_body
      %s17 = ssub.s32 %s12, 1
      %s18 = ssub.s32 %s12, 2
      %s25 = sadd.s32 1, %s20
      %p26 = scmp.ge.s32.totalorder %s25, 2
      %s27 = scalar_select %p26, 0, %s25
      %s28 = sadd.s32 1, %s19
      %s29 = scalar_select %p26, %s28, %s19
      %p30 = scmp.ge.s32.totalorder %s29, 2
      %s31 = scalar_select %p30, 0, %s29
      %s32 = ssub.s32 %s19, %s31
      %s33 = ssub.s32 %s20, %s27
      %s34 = sor.u32 %s32, %s33
      %p35 = scmp.eq.s32.totalorder %s34, 0
      %s37 = sadd.s32 %s36, 1
      %s38 = scalar_select %p35, %s36, %s37
      %p41 = pneg %p35
      %p42 = scmp.eq.s32.totalorder %s12, 3
      %p43 = por %p41, %p42
      %p44 = scmp.ne.s32.totalorder %s36, %s39
      %p45 = scmp.eq.s32.totalorder %s12, 0
      %p46 = por %p44, %p45
      %p47 = scmp.ne.s32.totalorder %s36, %s39
      %p48 = scmp.eq.s32.totalorder %s17, 3
      %p49 = por %p47, %p48
      %p50 = scmp.ne.s32.totalorder %s39, %s40
      %p51 = scmp.eq.s32.totalorder %s17, 0
      %p52 = por %p50, %p51
      %p53 = scmp.ne.s32.totalorder %s39, %s40
      %p54 = scmp.eq.s32.totalorder %s18, 3
      %p55 = por %p53, %p54
      %p57 = scmp.ne.s32.totalorder %s40, %s56
      %p58 = scmp.eq.s32.totalorder %s18, 0
      %p59 = por %p57, %p58
      %s61 = sadd.s32 %s60, 1
      %p64 = scmp.eq.s32.totalorder %s12, 3
      %p65 = scmp.ne.s32.totalorder %s60, %s62
      %p66 = scmp.eq.s32.totalorder %s12, 0
      %p67 = por %p65, %p66
      %p68 = scmp.ne.s32.totalorder %s60, %s62
      %p69 = scmp.eq.s32.totalorder %s17, 3
      %p70 = por %p68, %p69
      %p71 = scmp.ne.s32.totalorder %s62, %s63
      %p72 = scmp.eq.s32.totalorder %s17, 0
      %p73 = por %p71, %p72
      %p74 = scmp.ne.s32.totalorder %s62, %s63
      %p75 = scmp.eq.s32.totalorder %s18, 3
      %p76 = por %p74, %p75
      %p78 = scmp.ne.s32.totalorder %s63, %s77
      %p79 = scmp.eq.s32.totalorder %s18, 0
      %p80 = por %p78, %p79
      %s82 = sadd.s32 %s81, 1
      %p85 = scmp.eq.s32.totalorder %s12, 3
      %p86 = scmp.ne.s32.totalorder %s81, %s83
      %p87 = scmp.eq.s32.totalorder %s12, 0
      %p88 = por %p86, %p87
      %p89 = scmp.ne.s32.totalorder %s81, %s83
      %p90 = scmp.eq.s32.totalorder %s17, 3
      %p91 = por %p89, %p90
      %p92 = scmp.ne.s32.totalorder %s83, %s84
      %p93 = scmp.eq.s32.totalorder %s17, 0
      %p94 = por %p92, %p93
      %p95 = scmp.ne.s32.totalorder %s83, %s84
      %p96 = scmp.eq.s32.totalorder %s18, 3
      %p97 = por %p95, %p96
      %p99 = scmp.ne.s32.totalorder %s84, %s98
      %p100 = scmp.eq.s32.totalorder %s18, 0
      %p101 = por %p99, %p100
      %s102 = ssub.s32 %s19, %s31
      %s103 = ssub.s32 %s20, %s27
      %s104 = sor.u32 %s102, %s103
      %p105 = scmp.eq.s32.totalorder %s104, 0
      %s107 = sadd.s32 %s106, 1
      %s108 = scalar_select %p105, %s106, %s107
      %p111 = pneg %p105
      %p112 = scmp.eq.s32.totalorder %s12, 3
      %p113 = por %p111, %p112
      %p114 = scmp.ne.s32.totalorder %s106, %s109
      %p115 = scmp.eq.s32.totalorder %s12, 0
      %p116 = por %p114, %p115
      %p117 = scmp.ne.s32.totalorder %s106, %s109
      %p118 = scmp.eq.s32.totalorder %s17, 3
      %p119 = por %p117, %p118
      %p120 = scmp.ne.s32.totalorder %s109, %s110
      %p121 = scmp.eq.s32.totalorder %s17, 0
      %p122 = por %p120, %p121
      %p123 = scmp.ne.s32.totalorder %s109, %s110
      %p124 = scmp.eq.s32.totalorder %s18, 3
      %p125 = por %p123, %p124
      %p127 = scmp.ne.s32.totalorder %s110, %s126
      %p128 = scmp.eq.s32.totalorder %s18, 0
      %p129 = por %p127, %p128
      %p130 = scmp.le.s32.totalorder 1, %s12
      %p131 = scmp.lt.s32.totalorder %s12, 5
      %p132 = pnand %p130, %p131
      %p133 = pneg %p132
      // Predicated region
      $region9: #{s4_block_forward.1} parent=5 // pred_check
        _
      $region10: #{s4_block_forward.1} parent=5 // pred_check_branch
        %135 = sbr.rel (%p132) target = $region12
      $region11: #{s4_block_forward.1} parent=5 // pred_region
        %s136 = ssub.s32 %s12, 1
        // Predicated region
        $region13: #{s4_block_forward.1} parent=11 // pred_check
          %p137 = pneg %p73
        $region14: #{s4_block_forward.1} parent=11 // pred_check_branch
          %139 = sbr.rel (%p137) target = $region16
        $region15: #{s4_block_forward.1} parent=11 // pred_region
          _
        $region16: #{s4_block_forward.1} parent=11 // pred_fallthru
          _
        // Predicated region
        $region17: #{s4_block_forward.1} parent=11 // pred_check
          %p140 = pneg %p94
        $region18: #{s4_block_forward.1} parent=11 // pred_check_branch
          %142 = sbr.rel (%p140) target = $region20
        $region19: #{s4_block_forward.1} parent=11 // pred_region
          _
        $region20: #{s4_block_forward.1} parent=11 // pred_fallthru
          _
      $region12: #{s4_block_forward.1} parent=5 // pred_fallthru
        _
      %p143 = scmp.lt.s32.totalorder %s12, 4
      // Predicated region
      $region21: #{s4_block_forward.1} parent=5 // pred_check
        %p144 = pneg %p143
      $region22: #{s4_block_forward.1} parent=5 // pred_check_branch
        %146 = sbr.rel (%p144) target = $region24
      $region23: #{s4_block_forward.1} parent=5 // pred_region
        // Predicated region
        $region25: #{s4_block_forward.1} parent=23 // pred_check
          %p147 = pneg %p46
        $region26: #{s4_block_forward.1} parent=23 // pred_check_branch
          %149 = sbr.rel (%p147) target = $region28
        $region27: #{s4_block_forward.1} parent=23 // pred_region
          %s150 = sand.u32 %s36, 1
          %s151 = sand.u32 %s36, 1
          %s152 = smul.addr %s151, 256
          %s153 = scalar_lea.vmem [#allocation2], %s152
          %s154 = smul.u32 2, %s20
          %s155 = smul.addr %s19, 64
          %s156 = sadd.s32 %s154, %s155
          %s157 = smul.addr %s156, 8
          %s158 = scalar_lea.vmem %s0, %s157
          // Predicated region
          $region29: #{s4_block_forward.1} parent=27 // pred_check
            _
          $region30: #{s4_block_forward.1} parent=27 // pred_check_branch
            %160 = sbr.rel (0) target = $region32
          $region31: #{s4_block_forward.1} parent=27 // pred_region
            // Predicated region
            $region33: #{s4_block_forward.1} parent=31 // pred_check
              _
            $region34: #{s4_block_forward.1} parent=31 // pred_check_branch
              %162 = sbr.rel (0) target = $region36
            $region35: #{s4_block_forward.1} parent=31 // pred_region
              loop: start=0, step=1, limit=1
              $region37: #{s4_block_forward.1} parent=35 // loop_pre_header
                _
              $region38: #{s4_block_forward.1} parent=35 // loop_header
                %s164 = sphi 0, %s168
                %p165 = scmp.ge.s32.totalorder %s164, 1
                %s169 = sphi %s158, %s158
                %s170 = sphi %s153, %s153
              $region39: #{s4_block_forward.1} parent=35 // loop_header_branch
                %167 = sbr.rel (%p165) target = $region43
              $region40: #{s4_block_forward.1} parent=35 // loop_body
                %v171 = vld [vmem:[%s169] sm:$0xff]
                %172 = vst [vmem:[%s170] sm:$0xff] %v171
                %v173 = vld [vmem:[%s169 + $0x8] sm:$0xff]
                %174 = vst [vmem:[%s170 + $0x8] sm:$0xff] %v173
                %v175 = vld [vmem:[%s169 + $0x20] sm:$0xff]
                %176 = vst [vmem:[%s170 + $0x10] sm:$0xff] %v175
                %v177 = vld [vmem:[%s169 + $0x28] sm:$0xff]
                %178 = vst [vmem:[%s170 + $0x18] sm:$0xff] %v177
                %v179 = vld [vmem:[%s169 + $0x40] sm:$0xff]
                %180 = vst [vmem:[%s170 + $0x20] sm:$0xff] %v179
                %v181 = vld [vmem:[%s169 + $0x48] sm:$0xff]
                %182 = vst [vmem:[%s170 + $0x28] sm:$0xff] %v181
                %v183 = vld [vmem:[%s169 + $0x60] sm:$0xff]
                %184 = vst [vmem:[%s170 + $0x30] sm:$0xff] %v183
                %v185 = vld [vmem:[%s169 + $0x68] sm:$0xff]
                %186 = vst [vmem:[%s170 + $0x38] sm:$0xff] %v185
                %v187 = vld [vmem:[%s169 + $0x80] sm:$0xff]
                %188 = vst [vmem:[%s170 + $0x40] sm:$0xff] %v187
                %v189 = vld [vmem:[%s169 + $0x88] sm:$0xff]
                %190 = vst [vmem:[%s170 + $0x48] sm:$0xff] %v189
                %v191 = vld [vmem:[%s169 + $0xa0] sm:$0xff]
                %192 = vst [vmem:[%s170 + $0x50] sm:$0xff] %v191
                %v193 = vld [vmem:[%s169 + $0xa8] sm:$0xff]
                %194 = vst [vmem:[%s170 + $0x58] sm:$0xff] %v193
                %v195 = vld [vmem:[%s169 + $0xc0] sm:$0xff]
                %196 = vst [vmem:[%s170 + $0x60] sm:$0xff] %v195
                %v197 = vld [vmem:[%s169 + $0xc8] sm:$0xff]
                %198 = vst [vmem:[%s170 + $0x68] sm:$0xff] %v197
                %v199 = vld [vmem:[%s169 + $0xe0] sm:$0xff]
                %200 = vst [vmem:[%s170 + $0x70] sm:$0xff] %v199
                %v201 = vld [vmem:[%s169 + $0xe8] sm:$0xff]
                %202 = vst [vmem:[%s170 + $0x78] sm:$0xff] %v201
                %v203 = vld [vmem:[%s169 + $0x100] sm:$0xff]
                %204 = vst [vmem:[%s170 + $0x80] sm:$0xff] %v203
                %v205 = vld [vmem:[%s169 + $0x108] sm:$0xff]
                %206 = vst [vmem:[%s170 + $0x88] sm:$0xff] %v205
                %v207 = vld [vmem:[%s169 + $0x120] sm:$0xff]
                %208 = vst [vmem:[%s170 + $0x90] sm:$0xff] %v207
                %v209 = vld [vmem:[%s169 + $0x128] sm:$0xff]
                %210 = vst [vmem:[%s170 + $0x98] sm:$0xff] %v209
                %v211 = vld [vmem:[%s169 + $0x140] sm:$0xff]
                %212 = vst [vmem:[%s170 + $0xa0] sm:$0xff] %v211
                %v213 = vld [vmem:[%s169 + $0x148] sm:$0xff]
                %214 = vst [vmem:[%s170 + $0xa8] sm:$0xff] %v213
                %v215 = vld [vmem:[%s169 + $0x160] sm:$0xff]
                %216 = vst [vmem:[%s170 + $0xb0] sm:$0xff] %v215
                %v217 = vld [vmem:[%s169 + $0x168] sm:$0xff]
                %218 = vst [vmem:[%s170 + $0xb8] sm:$0xff] %v217
                %v219 = vld [vmem:[%s169 + $0x180] sm:$0xff]
                %220 = vst [vmem:[%s170 + $0xc0] sm:$0xff] %v219
                %v221 = vld [vmem:[%s169 + $0x188] sm:$0xff]
                %222 = vst [vmem:[%s170 + $0xc8] sm:$0xff] %v221
                %v223 = vld [vmem:[%s169 + $0x1a0] sm:$0xff]
                %224 = vst [vmem:[%s170 + $0xd0] sm:$0xff] %v223
                %v225 = vld [vmem:[%s169 + $0x1a8] sm:$0xff]
                %226 = vst [vmem:[%s170 + $0xd8] sm:$0xff] %v225
                %v227 = vld [vmem:[%s169 + $0x1c0] sm:$0xff]
                %228 = vst [vmem:[%s170 + $0xe0] sm:$0xff] %v227
                %v229 = vld [vmem:[%s169 + $0x1c8] sm:$0xff]
                %230 = vst [vmem:[%s170 + $0xe8] sm:$0xff] %v229
                %v231 = vld [vmem:[%s169 + $0x1e0] sm:$0xff]
                %232 = vst [vmem:[%s170 + $0xf0] sm:$0xff] %v231
                %v233 = vld [vmem:[%s169 + $0x1e8] sm:$0xff]
                %234 = vst [vmem:[%s170 + $0xf8] sm:$0xff] %v233
              $region41: #{s4_block_forward.1} parent=35 // loop_footer
                %s168 = sadd.s32 1, %s164
              $region42: #{s4_block_forward.1} parent=35 // loop_footer_branch
                %163 = sbr.rel target = $region38
              $region43: #{s4_block_forward.1} parent=35 // loop_exit
                _
            $region36: #{s4_block_forward.1} parent=31 // pred_fallthru
              _
            // Predicated region
            $region44: #{s4_block_forward.1} parent=31 // pred_check
              _
            $region45: #{s4_block_forward.1} parent=31 // pred_check_branch
              %236 = sbr.rel target = $region47
            $region46: #{s4_block_forward.1} parent=31 // pred_region
              _
            $region47: #{s4_block_forward.1} parent=31 // pred_fallthru
              _
          $region32: #{s4_block_forward.1} parent=27 // pred_fallthru
            _
          %237 = vnop
        $region28: #{s4_block_forward.1} parent=23 // pred_fallthru
          _
      $region24: #{s4_block_forward.1} parent=5 // pred_fallthru
        _
      %p238 = scmp.le.s32.totalorder 1, %s12
      %p239 = scmp.lt.s32.totalorder %s12, 5
      %p240 = pnand %p238, %p239
      %p241 = pneg %p240
      // Predicated region
      $region48: #{s4_block_forward.1} parent=5 // pred_check
        _
      $region49: #{s4_block_forward.1} parent=5 // pred_check_branch
        %243 = sbr.rel (%p240) target = $region51
      $region50: #{s4_block_forward.1} parent=5 // pred_region
        %s244 = ssub.s32 %s12, 1
        %s245 = sand.u32 %s39, 1
        %s246 = sand.u32 %s39, 1
        %s247 = smul.addr %s246, 256
        %s248 = scalar_lea.vmem [#allocation2], %s247
        // Predicated region
        $region52: #{s4_block_forward.1} parent=50 // pred_check
          %p249 = pneg %p52
        $region53: #{s4_block_forward.1} parent=50 // pred_check_branch
          %251 = sbr.rel (%p249) target = $region55
        $region54: #{s4_block_forward.1} parent=50 // pred_region
          _
        $region55: #{s4_block_forward.1} parent=50 // pred_fallthru
          _
        %s252 = sand.u32 %s39, 1
        %s253 = sand.u32 %s39, 1
        %s254 = smul.addr %s253, 256
        %s255 = scalar_lea.vmem [#allocation2], %s254
        %p256 = pneg %p52
        %p257 = pneg %p49
        %p258 = pneg %p73
        %p259 = pneg %p70
        %p260 = pneg %p94
        %p261 = pneg %p91
        %p262 = pneg %p122
        %p263 = pneg %p119
        %s264 = sand.u32 %s109, 1
        %s265 = scalar_lea.sflag [#allocation4], %s264
        %s266 = sand.u32 %s109, 1
        %s267 = smul.addr %s266, 256
        %s268 = scalar_lea.vmem [#allocation3], %s267
        %s269 = smul.u32 2, %s22
        %s270 = smul.u32 2, %s22
        %v272 = vld [vmem:[%s248] sm:$0xff]
        %v273 = vld [vmem:[%s248 + $0x8] sm:$0xff]
        %v274 = vld [vmem:[%s248 + $0x10] sm:$0xff]
        %v275 = vld [vmem:[%s248 + $0x18] sm:$0xff]
        %v276 = vld [vmem:[%s248 + $0x20] sm:$0xff]
        %v277 = vld [vmem:[%s248 + $0x28] sm:$0xff]
        %v278 = vld [vmem:[%s248 + $0x30] sm:$0xff]
        %v279 = vld [vmem:[%s248 + $0x38] sm:$0xff]
        %v280 = vld [vmem:[%s248 + $0x40] sm:$0xff]
        %v281 = vld [vmem:[%s248 + $0x48] sm:$0xff]
        %v282 = vld [vmem:[%s248 + $0x50] sm:$0xff]
        %v283 = vld [vmem:[%s248 + $0x58] sm:$0xff]
        %v284 = vld [vmem:[%s248 + $0x60] sm:$0xff]
        %v285 = vld [vmem:[%s248 + $0x68] sm:$0xff]
        %v286 = vld [vmem:[%s248 + $0x70] sm:$0xff]
        %v287 = vld [vmem:[%s248 + $0x78] sm:$0xff]
        %v288 = vld [vmem:[%s248 + $0x80] sm:$0xff]
        %v289 = vld [vmem:[%s248 + $0x88] sm:$0xff]
        %v290 = vld [vmem:[%s248 + $0x90] sm:$0xff]
        %v291 = vld [vmem:[%s248 + $0x98] sm:$0xff]
        %v292 = vld [vmem:[%s248 + $0xa0] sm:$0xff]
        %v293 = vld [vmem:[%s248 + $0xa8] sm:$0xff]
        %v294 = vld [vmem:[%s248 + $0xb0] sm:$0xff]
        %v295 = vld [vmem:[%s248 + $0xb8] sm:$0xff]
        %v296 = vld [vmem:[%s248 + $0xc0] sm:$0xff]
        %v297 = vld [vmem:[%s248 + $0xc8] sm:$0xff]
        %v298 = vld [vmem:[%s248 + $0xd0] sm:$0xff]
        %v299 = vld [vmem:[%s248 + $0xd8] sm:$0xff]
        %v300 = vld [vmem:[%s248 + $0xe0] sm:$0xff]
        %v301 = vld [vmem:[%s248 + $0xe8] sm:$0xff]
        %v302 = vld [vmem:[%s248 + $0xf0] sm:$0xff]
        %v303 = vld [vmem:[%s248 + $0xf8] sm:$0xff]
        %v304 = vmul.f32 %v272, %v272
        %v305 = vmul.f32 %v273, %v273
        %v306 = vmul.f32 %v274, %v274
        %v307 = vmul.f32 %v275, %v275
        %v308 = vmul.f32 %v276, %v276
        %v309 = vmul.f32 %v277, %v277
        %v310 = vmul.f32 %v278, %v278
        %v311 = vmul.f32 %v279, %v279
        %v312 = vmul.f32 %v280, %v280
        %v313 = vmul.f32 %v281, %v281
        %v314 = vmul.f32 %v282, %v282
        %v315 = vmul.f32 %v283, %v283
        %v316 = vmul.f32 %v284, %v284
        %v317 = vmul.f32 %v285, %v285
        %v318 = vmul.f32 %v286, %v286
        %v319 = vmul.f32 %v287, %v287
        %v320 = vmul.f32 %v288, %v288
        %v321 = vmul.f32 %v289, %v289
        %v322 = vmul.f32 %v290, %v290
        %v323 = vmul.f32 %v291, %v291
        %v324 = vmul.f32 %v292, %v292
        %v325 = vmul.f32 %v293, %v293
        %v326 = vmul.f32 %v294, %v294
        %v327 = vmul.f32 %v295, %v295
        %v328 = vmul.f32 %v296, %v296
        %v329 = vmul.f32 %v297, %v297
        %v330 = vmul.f32 %v298, %v298
        %v331 = vmul.f32 %v299, %v299
        %v332 = vmul.f32 %v300, %v300
        %v333 = vmul.f32 %v301, %v301
        %v334 = vmul.f32 %v302, %v302
        %v335 = vmul.f32 %v303, %v303
        %v336 = vmul.f32 %v272, %v304
        %v337 = vmul.f32 %v273, %v305
        %v338 = vmul.f32 %v274, %v306
        %v339 = vmul.f32 %v275, %v307
        %v340 = vmul.f32 %v276, %v308
        %v341 = vmul.f32 %v277, %v309
        %v342 = vmul.f32 %v278, %v310
        %v343 = vmul.f32 %v279, %v311
        %v344 = vmul.f32 %v280, %v312
        %v345 = vmul.f32 %v281, %v313
        %v346 = vmul.f32 %v282, %v314
        %v347 = vmul.f32 %v283, %v315
        %v348 = vmul.f32 %v284, %v316
        %v349 = vmul.f32 %v285, %v317
        %v350 = vmul.f32 %v286, %v318
        %v351 = vmul.f32 %v287, %v319
        %v352 = vmul.f32 %v288, %v320
        %v353 = vmul.f32 %v289, %v321
        %v354 = vmul.f32 %v290, %v322
        %v355 = vmul.f32 %v291, %v323
        %v356 = vmul.f32 %v292, %v324
        %v357 = vmul.f32 %v293, %v325
        %v358 = vmul.f32 %v294, %v326
        %v359 = vmul.f32 %v295, %v327
        %v360 = vmul.f32 %v296, %v328
        %v361 = vmul.f32 %v297, %v329
        %v362 = vmul.f32 %v298, %v330
        %v363 = vmul.f32 %v299, %v331
        %v364 = vmul.f32 %v300, %v332
        %v365 = vmul.f32 %v301, %v333
        %v366 = vmul.f32 %v302, %v334
        %v367 = vmul.f32 %v303, %v335
        %v368 = vmul.f32 %v336, 0.044715
        %v369 = vmul.f32 %v337, 0.044715
        %v370 = vmul.f32 %v338, 0.044715
        %v371 = vmul.f32 %v339, 0.044715
        %v372 = vmul.f32 %v340, 0.044715
        %v373 = vmul.f32 %v341, 0.044715
        %v374 = vmul.f32 %v342, 0.044715
        %v375 = vmul.f32 %v343, 0.044715
        %v376 = vmul.f32 %v344, 0.044715
        %v377 = vmul.f32 %v345, 0.044715
        %v378 = vmul.f32 %v346, 0.044715
        %v379 = vmul.f32 %v347, 0.044715
        %v380 = vmul.f32 %v348, 0.044715
        %v381 = vmul.f32 %v349, 0.044715
        %v382 = vmul.f32 %v350, 0.044715
        %v383 = vmul.f32 %v351, 0.044715
        %v384 = vmul.f32 %v352, 0.044715
        %v385 = vmul.f32 %v353, 0.044715
        %v386 = vmul.f32 %v354, 0.044715
        %v387 = vmul.f32 %v355, 0.044715
        %v388 = vmul.f32 %v356, 0.044715
        %v389 = vmul.f32 %v357, 0.044715
        %v390 = vmul.f32 %v358, 0.044715
        %v391 = vmul.f32 %v359, 0.044715
        %v392 = vmul.f32 %v360, 0.044715
        %v393 = vmul.f32 %v361, 0.044715
        %v394 = vmul.f32 %v362, 0.044715
        %v395 = vmul.f32 %v363, 0.044715
        %v396 = vmul.f32 %v364, 0.044715
        %v397 = vmul.f32 %v365, 0.044715
        %v398 = vmul.f32 %v366, 0.044715
        %v399 = vmul.f32 %v367, 0.044715
        %v400 = vadd.f32 %v272, %v368
        %v401 = vadd.f32 %v273, %v369
        %v402 = vadd.f32 %v274, %v370
        %v403 = vadd.f32 %v275, %v371
        %v404 = vadd.f32 %v276, %v372
        %v405 = vadd.f32 %v277, %v373
        %v406 = vadd.f32 %v278, %v374
        %v407 = vadd.f32 %v279, %v375
        %v408 = vadd.f32 %v280, %v376
        %v409 = vadd.f32 %v281, %v377
        %v410 = vadd.f32 %v282, %v378
        %v411 = vadd.f32 %v283, %v379
        %v412 = vadd.f32 %v284, %v380
        %v413 = vadd.f32 %v285, %v381
        %v414 = vadd.f32 %v286, %v382
        %v415 = vadd.f32 %v287, %v383
        %v416 = vadd.f32 %v288, %v384
        %v417 = vadd.f32 %v289, %v385
        %v418 = vadd.f32 %v290, %v386
        %v419 = vadd.f32 %v291, %v387
        %v420 = vadd.f32 %v292, %v388
        %v421 = vadd.f32 %v293, %v389
        %v422 = vadd.f32 %v294, %v390
        %v423 = vadd.f32 %v295, %v391
        %v424 = vadd.f32 %v296, %v392
        %v425 = vadd.f32 %v297, %v393
        %v426 = vadd.f32 %v298, %v394
        %v427 = vadd.f32 %v299, %v395
        %v428 = vadd.f32 %v300, %v396
        %v429 = vadd.f32 %v301, %v397
        %v430 = vadd.f32 %v302, %v398
        %v431 = vadd.f32 %v303, %v399
        %v432 = vmul.f32 %v400, 0.7978846
        %v433 = vmul.f32 %v401, 0.7978846
        %v434 = vmul.f32 %v402, 0.7978846
        %v435 = vmul.f32 %v403, 0.7978846
        %v436 = vmul.f32 %v404, 0.7978846
        %v437 = vmul.f32 %v405, 0.7978846
        %v438 = vmul.f32 %v406, 0.7978846
        %v439 = vmul.f32 %v407, 0.7978846
        %v440 = vmul.f32 %v408, 0.7978846
        %v441 = vmul.f32 %v409, 0.7978846
        %v442 = vmul.f32 %v410, 0.7978846
        %v443 = vmul.f32 %v411, 0.7978846
        %v444 = vmul.f32 %v412, 0.7978846
        %v445 = vmul.f32 %v413, 0.7978846
        %v446 = vmul.f32 %v414, 0.7978846
        %v447 = vmul.f32 %v415, 0.7978846
        %v448 = vmul.f32 %v416, 0.7978846
        %v449 = vmul.f32 %v417, 0.7978846
        %v450 = vmul.f32 %v418, 0.7978846
        %v451 = vmul.f32 %v419, 0.7978846
        %v452 = vmul.f32 %v420, 0.7978846
        %v453 = vmul.f32 %v421, 0.7978846
        %v454 = vmul.f32 %v422, 0.7978846
        %v455 = vmul.f32 %v423, 0.7978846
        %v456 = vmul.f32 %v424, 0.7978846
        %v457 = vmul.f32 %v425, 0.7978846
        %v458 = vmul.f32 %v426, 0.7978846
        %v459 = vmul.f32 %v427, 0.7978846
        %v460 = vmul.f32 %v428, 0.7978846
        %v461 = vmul.f32 %v429, 0.7978846
        %v462 = vmul.f32 %v430, 0.7978846
        %v463 = vmul.f32 %v431, 0.7978846
        %v464 = vtanh.pop %v432
        %v465 = vtanh.pop %v433
        %v466 = vtanh.pop %v434
        %v467 = vtanh.pop %v435
        %v468 = vtanh.pop %v436
        %v469 = vtanh.pop %v437
        %v470 = vtanh.pop %v438
        %v471 = vtanh.pop %v439
        %v472 = vtanh.pop %v440
        %v473 = vtanh.pop %v441
        %v474 = vtanh.pop %v442
        %v475 = vtanh.pop %v443
        %v476 = vtanh.pop %v444
        %v477 = vtanh.pop %v445
        %v478 = vtanh.pop %v446
        %v479 = vtanh.pop %v447
        %v480 = vtanh.pop %v448
        %v481 = vtanh.pop %v449
        %v482 = vtanh.pop %v450
        %v483 = vtanh.pop %v451
        %v484 = vtanh.pop %v452
        %v485 = vtanh.pop %v453
        %v486 = vtanh.pop %v454
        %v487 = vtanh.pop %v455
        %v488 = vtanh.pop %v456
        %v489 = vtanh.pop %v457
        %v490 = vtanh.pop %v458
        %v491 = vtanh.pop %v459
        %v492 = vtanh.pop %v460
        %v493 = vtanh.pop %v461
        %v494 = vtanh.pop %v462
        %v495 = vtanh.pop %v463
        %v496 = vadd.f32 %v464, 1.0
        %v497 = vadd.f32 %v465, 1.0
        %v498 = vadd.f32 %v466, 1.0
        %v499 = vadd.f32 %v467, 1.0
        %v500 = vadd.f32 %v468, 1.0
        %v501 = vadd.f32 %v469, 1.0
        %v502 = vadd.f32 %v470, 1.0
        %v503 = vadd.f32 %v471, 1.0
        %v504 = vadd.f32 %v472, 1.0
        %v505 = vadd.f32 %v473, 1.0
        %v506 = vadd.f32 %v474, 1.0
        %v507 = vadd.f32 %v475, 1.0
        %v508 = vadd.f32 %v476, 1.0
        %v509 = vadd.f32 %v477, 1.0
        %v510 = vadd.f32 %v478, 1.0
        %v511 = vadd.f32 %v479, 1.0
        %v512 = vadd.f32 %v480, 1.0
        %v513 = vadd.f32 %v481, 1.0
        %v514 = vadd.f32 %v482, 1.0
        %v515 = vadd.f32 %v483, 1.0
        %v516 = vadd.f32 %v484, 1.0
        %v517 = vadd.f32 %v485, 1.0
        %v518 = vadd.f32 %v486, 1.0
        %v519 = vadd.f32 %v487, 1.0
        %v520 = vadd.f32 %v488, 1.0
        %v521 = vadd.f32 %v489, 1.0
        %v522 = vadd.f32 %v490, 1.0
        %v523 = vadd.f32 %v491, 1.0
        %v524 = vadd.f32 %v492, 1.0
        %v525 = vadd.f32 %v493, 1.0
        %v526 = vadd.f32 %v494, 1.0
        %v527 = vadd.f32 %v495, 1.0
        %v528 = vmul.f32 %v496, 0.5
        %v529 = vmul.f32 %v497, 0.5
        %v530 = vmul.f32 %v498, 0.5
        %v531 = vmul.f32 %v499, 0.5
        %v532 = vmul.f32 %v500, 0.5
        %v533 = vmul.f32 %v501, 0.5
        %v534 = vmul.f32 %v502, 0.5
        %v535 = vmul.f32 %v503, 0.5
        %v536 = vmul.f32 %v504, 0.5
        %v537 = vmul.f32 %v505, 0.5
        %v538 = vmul.f32 %v506, 0.5
        %v539 = vmul.f32 %v507, 0.5
        %v540 = vmul.f32 %v508, 0.5
        %v541 = vmul.f32 %v509, 0.5
        %v542 = vmul.f32 %v510, 0.5
        %v543 = vmul.f32 %v511, 0.5
        %v544 = vmul.f32 %v512, 0.5
        %v545 = vmul.f32 %v513, 0.5
        %v546 = vmul.f32 %v514, 0.5
        %v547 = vmul.f32 %v515, 0.5
        %v548 = vmul.f32 %v516, 0.5
        %v549 = vmul.f32 %v517, 0.5
        %v550 = vmul.f32 %v518, 0.5
        %v551 = vmul.f32 %v519, 0.5
        %v552 = vmul.f32 %v520, 0.5
        %v553 = vmul.f32 %v521, 0.5
        %v554 = vmul.f32 %v522, 0.5
        %v555 = vmul.f32 %v523, 0.5
        %v556 = vmul.f32 %v524, 0.5
        %v557 = vmul.f32 %v525, 0.5
        %v558 = vmul.f32 %v526, 0.5
        %v559 = vmul.f32 %v527, 0.5
        %v560 = vmul.f32 %v272, %v528
        %v561 = vmul.f32 %v273, %v529
        %v562 = vmul.f32 %v274, %v530
        %v563 = vmul.f32 %v275, %v531
        %v564 = vmul.f32 %v276, %v532
        %v565 = vmul.f32 %v277, %v533
        %v566 = vmul.f32 %v278, %v534
        %v567 = vmul.f32 %v279, %v535
        %v568 = vmul.f32 %v280, %v536
        %v569 = vmul.f32 %v281, %v537
        %v570 = vmul.f32 %v282, %v538
        %v571 = vmul.f32 %v283, %v539
        %v572 = vmul.f32 %v284, %v540
        %v573 = vmul.f32 %v285, %v541
        %v574 = vmul.f32 %v286, %v542
        %v575 = vmul.f32 %v287, %v543
        %v576 = vmul.f32 %v288, %v544
        %v577 = vmul.f32 %v289, %v545
        %v578 = vmul.f32 %v290, %v546
        %v579 = vmul.f32 %v291, %v547
        %v580 = vmul.f32 %v292, %v548
        %v581 = vmul.f32 %v293, %v549
        %v582 = vmul.f32 %v294, %v550
        %v583 = vmul.f32 %v295, %v551
        %v584 = vmul.f32 %v296, %v552
        %v585 = vmul.f32 %v297, %v553
        %v586 = vmul.f32 %v298, %v554
        %v587 = vmul.f32 %v299, %v555
        %v588 = vmul.f32 %v300, %v556
        %v589 = vmul.f32 %v301, %v557
        %v590 = vmul.f32 %v302, %v558
        %v591 = vmul.f32 %v303, %v559
        %v592 = vld [vmem:[%s1] sm:$0xf]
        %v593 = vld [vmem:[%s1 + $0x4] sm:$0xf]
        %v594 = vld [vmem:[%s1 + $0x8] sm:$0xf]
        %v595 = vld [vmem:[%s1 + $0xc] sm:$0xf]
        %v596 = vld [vmem:[%s1 + $0x10] sm:$0xf]
        %v597 = vld [vmem:[%s1 + $0x14] sm:$0xf]
        %v598 = vld [vmem:[%s1 + $0x18] sm:$0xf]
        %v599 = vld [vmem:[%s1 + $0x1c] sm:$0xf]
        %v600 = vld [vmem:[%s1 + $0x20] sm:$0xf]
        %v601 = vld [vmem:[%s1 + $0x24] sm:$0xf]
        %v602 = vld [vmem:[%s1 + $0x28] sm:$0xf]
        %v603 = vld [vmem:[%s1 + $0x2c] sm:$0xf]
        %v604 = vld [vmem:[%s1 + $0x30] sm:$0xf]
        %v605 = vld [vmem:[%s1 + $0x34] sm:$0xf]
        %v606 = vld [vmem:[%s1 + $0x38] sm:$0xf]
        %v607 = vld [vmem:[%s1 + $0x3c] sm:$0xf]
        %v608 = vld [vmem:[%s1 + $0x40] sm:$0xf]
        %v609 = vld [vmem:[%s1 + $0x44] sm:$0xf]
        %v610 = vld [vmem:[%s1 + $0x48] sm:$0xf]
        %v611 = vld [vmem:[%s1 + $0x4c] sm:$0xf]
        %v612 = vld [vmem:[%s1 + $0x50] sm:$0xf]
        %v613 = vld [vmem:[%s1 + $0x54] sm:$0xf]
        %v614 = vld [vmem:[%s1 + $0x58] sm:$0xf]
        %v615 = vld [vmem:[%s1 + $0x5c] sm:$0xf]
        %v616 = vld [vmem:[%s1 + $0x60] sm:$0xf]
        %v617 = vld [vmem:[%s1 + $0x64] sm:$0xf]
        %v618 = vld [vmem:[%s1 + $0x68] sm:$0xf]
        %v619 = vld [vmem:[%s1 + $0x6c] sm:$0xf]
        %v620 = vld [vmem:[%s1 + $0x70] sm:$0xf]
        %v621 = vld [vmem:[%s1 + $0x74] sm:$0xf]
        %v622 = vld [vmem:[%s1 + $0x78] sm:$0xf]
        %v623 = vld [vmem:[%s1 + $0x7c] sm:$0xf]
        %v624 = vpack.c.bf16 %v562, %v560
        %v625 = vpack.c.bf16 %v563, %v561
        %v626 = vpack.c.bf16 %v566, %v564
        %v627 = vpack.c.bf16 %v567, %v565
        %v628 = vpack.c.bf16 %v570, %v568
        %v629 = vpack.c.bf16 %v571, %v569
        %v630 = vpack.c.bf16 %v574, %v572
        %v631 = vpack.c.bf16 %v575, %v573
        %v632 = vpack.c.bf16 %v578, %v576
        %v633 = vpack.c.bf16 %v579, %v577
        %v634 = vpack.c.bf16 %v582, %v580
        %v635 = vpack.c.bf16 %v583, %v581
        %v636 = vpack.c.bf16 %v586, %v584
        %v637 = vpack.c.bf16 %v587, %v585
        %v638 = vpack.c.bf16 %v590, %v588
        %v639 = vpack.c.bf16 %v591, %v589
        %v640 = vld [vmem:[%s2] sm:$0xff]
        %v641 = vld [vmem:[%s2 + $0x8] sm:$0xff]
        %v642 = vld [vmem:[%s2 + $0x10] sm:$0xff]
        %v643 = vld [vmem:[%s2 + $0x18] sm:$0xff]
        %v644 = vld [vmem:[%s2 + $0x20] sm:$0xff]
        %v645 = vld [vmem:[%s2 + $0x28] sm:$0xff]
        %v646 = vld [vmem:[%s2 + $0x30] sm:$0xff]
        %v647 = vld [vmem:[%s2 + $0x38] sm:$0xff]
        %v648 = vld [vmem:[%s2 + $0x40] sm:$0xff]
        %v649 = vld [vmem:[%s2 + $0x48] sm:$0xff]
        %v650 = vld [vmem:[%s2 + $0x50] sm:$0xff]
        %v651 = vld [vmem:[%s2 + $0x58] sm:$0xff]
        %v652 = vld [vmem:[%s2 + $0x60] sm:$0xff]
        %v653 = vld [vmem:[%s2 + $0x68] sm:$0xff]
        %v654 = vld [vmem:[%s2 + $0x70] sm:$0xff]
        %v655 = vld [vmem:[%s2 + $0x78] sm:$0xff]
        %v656 = vld [vmem:[%s2 + $0x80] sm:$0xff]
        %v657 = vld [vmem:[%s2 + $0x88] sm:$0xff]
        %v658 = vld [vmem:[%s2 + $0x90] sm:$0xff]
        %v659 = vld [vmem:[%s2 + $0x98] sm:$0xff]
        %v660 = vld [vmem:[%s2 + $0xa0] sm:$0xff]
        %v661 = vld [vmem:[%s2 + $0xa8] sm:$0xff]
        %v662 = vld [vmem:[%s2 + $0xb0] sm:$0xff]
        %v663 = vld [vmem:[%s2 + $0xb8] sm:$0xff]
        %v664 = vld [vmem:[%s2 + $0xc0] sm:$0xff]
        %v665 = vld [vmem:[%s2 + $0xc8] sm:$0xff]
        %v666 = vld [vmem:[%s2 + $0xd0] sm:$0xff]
        %v667 = vld [vmem:[%s2 + $0xd8] sm:$0xff]
        %v668 = vld [vmem:[%s2 + $0xe0] sm:$0xff]
        %v669 = vld [vmem:[%s2 + $0xe8] sm:$0xff]
        %v670 = vld [vmem:[%s2 + $0xf0] sm:$0xff]
        %v671 = vld [vmem:[%s2 + $0xf8] sm:$0xff]
        %673 = vset.pattern.permute.xlu0 0
        %674 = vperm.xlu0 %673, %v640
        %v675 = vpop.permute.xlu0 %674
        %678 = vset.pattern.permute.xlu0 0
        %679 = vperm.xlu0 %678, %v641
        %v680 = vpop.permute.xlu0 %679
        %683 = vset.pattern.permute.xlu0 0
        %684 = vperm.xlu0 %683, %v642
        %v685 = vpop.permute.xlu0 %684
        %688 = vset.pattern.permute.xlu0 0
        %689 = vperm.xlu0 %688, %v643
        %v690 = vpop.permute.xlu0 %689
        %693 = vset.pattern.permute.xlu0 0
        %694 = vperm.xlu0 %693, %v644
        %v695 = vpop.permute.xlu0 %694
        %698 = vset.pattern.permute.xlu0 0
        %699 = vperm.xlu0 %698, %v645
        %v700 = vpop.permute.xlu0 %699
        %703 = vset.pattern.permute.xlu0 0
        %704 = vperm.xlu0 %703, %v646
        %v705 = vpop.permute.xlu0 %704
        %708 = vset.pattern.permute.xlu0 0
        %709 = vperm.xlu0 %708, %v647
        %v710 = vpop.permute.xlu0 %709
        %713 = vset.pattern.permute.xlu0 0
        %714 = vperm.xlu0 %713, %v648
        %v715 = vpop.permute.xlu0 %714
        %718 = vset.pattern.permute.xlu0 0
        %719 = vperm.xlu0 %718, %v649
        %v720 = vpop.permute.xlu0 %719
        %723 = vset.pattern.permute.xlu0 0
        %724 = vperm.xlu0 %723, %v650
        %v725 = vpop.permute.xlu0 %724
        %728 = vset.pattern.permute.xlu0 0
        %729 = vperm.xlu0 %728, %v651
        %v730 = vpop.permute.xlu0 %729
        %733 = vset.pattern.permute.xlu0 0
        %734 = vperm.xlu0 %733, %v652
        %v735 = vpop.permute.xlu0 %734
        %738 = vset.pattern.permute.xlu0 0
        %739 = vperm.xlu0 %738, %v653
        %v740 = vpop.permute.xlu0 %739
        %743 = vset.pattern.permute.xlu0 0
        %744 = vperm.xlu0 %743, %v654
        %v745 = vpop.permute.xlu0 %744
        %748 = vset.pattern.permute.xlu0 0
        %749 = vperm.xlu0 %748, %v655
        %v750 = vpop.permute.xlu0 %749
        %753 = vset.pattern.permute.xlu0 0
        %754 = vperm.xlu0 %753, %v656
        %v755 = vpop.permute.xlu0 %754
        %758 = vset.pattern.permute.xlu0 0
        %759 = vperm.xlu0 %758, %v657
        %v760 = vpop.permute.xlu0 %759
        %763 = vset.pattern.permute.xlu0 0
        %764 = vperm.xlu0 %763, %v658
        %v765 = vpop.permute.xlu0 %764
        %768 = vset.pattern.permute.xlu0 0
        %769 = vperm.xlu0 %768, %v659
        %v770 = vpop.permute.xlu0 %769
        %773 = vset.pattern.permute.xlu0 0
        %774 = vperm.xlu0 %773, %v660
        %v775 = vpop.permute.xlu0 %774
        %778 = vset.pattern.permute.xlu0 0
        %779 = vperm.xlu0 %778, %v661
        %v780 = vpop.permute.xlu0 %779
        %783 = vset.pattern.permute.xlu0 0
        %784 = vperm.xlu0 %783, %v662
        %v785 = vpop.permute.xlu0 %784
        %788 = vset.pattern.permute.xlu0 0
        %789 = vperm.xlu0 %788, %v663
        %v790 = vpop.permute.xlu0 %789
        %793 = vset.pattern.permute.xlu0 0
        %794 = vperm.xlu0 %793, %v664
        %v795 = vpop.permute.xlu0 %794
        %798 = vset.pattern.permute.xlu0 0
        %799 = vperm.xlu0 %798, %v665
        %v800 = vpop.permute.xlu0 %799
        %803 = vset.pattern.permute.xlu0 0
        %804 = vperm.xlu0 %803, %v666
        %v805 = vpop.permute.xlu0 %804
        %808 = vset.pattern.permute.xlu0 0
        %809 = vperm.xlu0 %808, %v667
        %v810 = vpop.permute.xlu0 %809
        %813 = vset.pattern.permute.xlu0 0
        %814 = vperm.xlu0 %813, %v668
        %v815 = vpop.permute.xlu0 %814
        %818 = vset.pattern.permute.xlu0 0
        %819 = vperm.xlu0 %818, %v669
        %v820 = vpop.permute.xlu0 %819
        %823 = vset.pattern.permute.xlu0 0
        %824 = vperm.xlu0 %823, %v670
        %v825 = vpop.permute.xlu0 %824
        %828 = vset.pattern.permute.xlu0 0
        %829 = vperm.xlu0 %828, %v671
        %v830 = vpop.permute.xlu0 %829
        %v864 = vunpack.c.l.b16 %v592
        %v865 = vunpack.c.l.b16 %v593
        %v866 = vunpack.c.l.b16 %v594
        %v867 = vunpack.c.l.b16 %v595
        %v868 = vunpack.c.l.b16 %v596
        %v869 = vunpack.c.l.b16 %v597
        %v870 = vunpack.c.l.b16 %v598
        %v871 = vunpack.c.l.b16 %v599
        %v872 = vunpack.c.l.b16 %v600
        %v873 = vunpack.c.l.b16 %v601
        %v874 = vunpack.c.l.b16 %v602
        %v875 = vunpack.c.l.b16 %v603
        %v876 = vunpack.c.l.b16 %v604
        %v877 = vunpack.c.l.b16 %v605
        %v878 = vunpack.c.l.b16 %v606
        %v879 = vunpack.c.l.b16 %v607
        %v880 = vunpack.c.l.b16 %v608
        %v881 = vunpack.c.l.b16 %v609
        %v882 = vunpack.c.l.b16 %v610
        %v883 = vunpack.c.l.b16 %v611
        %v884 = vunpack.c.l.b16 %v612
        %v885 = vunpack.c.l.b16 %v613
        %v886 = vunpack.c.l.b16 %v614
        %v887 = vunpack.c.l.b16 %v615
        %v888 = vunpack.c.l.b16 %v616
        %v889 = vunpack.c.l.b16 %v617
        %v890 = vunpack.c.l.b16 %v618
        %v891 = vunpack.c.l.b16 %v619
        %v892 = vunpack.c.l.b16 %v620
        %v893 = vunpack.c.l.b16 %v621
        %v894 = vunpack.c.l.b16 %v622
        %v895 = vunpack.c.l.b16 %v623
        %v896 = vpack.c.b16 %v865, %v864
        %v897 = vpack.c.b16 %v867, %v866
        %v898 = vpack.c.b16 %v869, %v868
        %v899 = vpack.c.b16 %v871, %v870
        %v900 = vpack.c.b16 %v873, %v872
        %v901 = vpack.c.b16 %v875, %v874
        %v902 = vpack.c.b16 %v877, %v876
        %v903 = vpack.c.b16 %v879, %v878
        %v904 = vpack.c.b16 %v881, %v880
        %v905 = vpack.c.b16 %v883, %v882
        %v906 = vpack.c.b16 %v885, %v884
        %v907 = vpack.c.b16 %v887, %v886
        %v908 = vpack.c.b16 %v889, %v888
        %v909 = vpack.c.b16 %v891, %v890
        %v910 = vpack.c.b16 %v893, %v892
        %v911 = vpack.c.b16 %v895, %v894
        %928 = vmatprep.subr.bf16.mxu0 %v639
        %929 = vmatpush1.bf16.msra.mxu0 %v638
        %930 = vmatprep.subr.bf16.mxu0 %v637
        %931 = vmatpush1.bf16.msra.mxu0 %v636
        %932 = vmatprep.subr.bf16.mxu0 %v635
        %933 = vmatpush1.bf16.msra.mxu0 %v634
        %934 = vmatprep.subr.bf16.mxu0 %v633
        %935 = vmatpush1.bf16.msra.mxu0 %v632
        %936 = vmatprep.subr.bf16.mxu0 %v631
        %937 = vmatpush1.bf16.msra.mxu0 %v630
        %938 = vmatprep.subr.bf16.mxu0 %v629
        %939 = vmatpush1.bf16.msra.mxu0 %v628
        %940 = vmatprep.subr.bf16.mxu0 %v627
        %941 = vmatpush1.bf16.msra.mxu0 %v626
        %942 = vmatprep.subr.bf16.mxu0 %v625
        %943 = vmatpush1.bf16.msra.mxu0 %v624
        %944 = vmatprep.subr.bf16.mxu0 0
        %945 = vmatpush2.bf16.msra.mxu0 0
        %946 = vmatprep.subr.bf16.mxu0 0
        %947 = vmatpush2.bf16.msra.mxu0 0
        %948 = vmatprep.subr.bf16.mxu0 0
        %949 = vmatpush2.bf16.msra.mxu0 0
        %950 = vmatprep.subr.bf16.mxu0 0
        %951 = vmatpush2.bf16.msra.mxu0 0
        %952 = vmatprep.subr.bf16.mxu0 0
        %953 = vmatpush2.bf16.msra.mxu0 0
        %954 = vmatprep.subr.bf16.mxu0 0
        %955 = vmatpush2.bf16.msra.mxu0 0
        %956 = vmatprep.subr.bf16.mxu0 0
        %957 = vmatpush2.bf16.msra.mxu0 0
        %958 = vmatprep.subr.bf16.mxu0 0
        %959 = vmatpush2.bf16.msra.mxu0 0
        %960 = vmatprep.mubr.bf16.mxu0 0
        %961 = vmatmul.mubr.bf16.gmra.mxu0 %v896
        %v962 = vpop.f32.mrf.mxu0
        %v963 = vadd.f32 %v675, %v962
        %v964 = vpop.f32.mrf.mxu0
        %v965 = vadd.f32 %v675, %v964
        %v966 = vpop.f32.mrf.mxu0
        %v967 = vadd.f32 %v680, %v966
        %v968 = vpop.f32.mrf.mxu0
        %v969 = vadd.f32 %v680, %v968
        %970 = vmatprep.mubr.bf16.mxu0 0
        %971 = vmatmul.mubr.bf16.gmra.mxu0 %v897
        %v972 = vpop.f32.mrf.mxu0
        %v973 = vadd.f32 %v685, %v972
        %v974 = vpop.f32.mrf.mxu0
        %v975 = vadd.f32 %v685, %v974
        %v976 = vpop.f32.mrf.mxu0
        %v977 = vadd.f32 %v690, %v976
        %v978 = vpop.f32.mrf.mxu0
        %v979 = vadd.f32 %v690, %v978
        %980 = vmatprep.mubr.bf16.mxu0 0
        %981 = vmatmul.mubr.bf16.gmra.mxu0 %v898
        %v982 = vpop.f32.mrf.mxu0
        %v983 = vadd.f32 %v695, %v982
        %v984 = vpop.f32.mrf.mxu0
        %v985 = vadd.f32 %v695, %v984
        %v986 = vpop.f32.mrf.mxu0
        %v987 = vadd.f32 %v700, %v986
        %v988 = vpop.f32.mrf.mxu0
        %v989 = vadd.f32 %v700, %v988
        %990 = vmatprep.mubr.bf16.mxu0 0
        %991 = vmatmul.mubr.bf16.gmra.mxu0 %v899
        %v992 = vpop.f32.mrf.mxu0
        %v993 = vadd.f32 %v705, %v992
        %v994 = vpop.f32.mrf.mxu0
        %v995 = vadd.f32 %v705, %v994
        %v996 = vpop.f32.mrf.mxu0
        %v997 = vadd.f32 %v710, %v996
        %v998 = vpop.f32.mrf.mxu0
        %v999 = vadd.f32 %v710, %v998
        %1000 = vmatprep.mubr.bf16.mxu0 0
        %1001 = vmatmul.mubr.bf16.gmra.mxu0 %v900
        %v1002 = vpop.f32.mrf.mxu0
        %v1003 = vadd.f32 %v715, %v1002
        %v1004 = vpop.f32.mrf.mxu0
        %v1005 = vadd.f32 %v715, %v1004
        %v1006 = vpop.f32.mrf.mxu0
        %v1007 = vadd.f32 %v720, %v1006
        %v1008 = vpop.f32.mrf.mxu0
        %v1009 = vadd.f32 %v720, %v1008
        %1010 = vmatprep.mubr.bf16.mxu0 0
        %1011 = vmatmul.mubr.bf16.gmra.mxu0 %v901
        %v1012 = vpop.f32.mrf.mxu0
        %v1013 = vadd.f32 %v725, %v1012
        %v1014 = vpop.f32.mrf.mxu0
        %v1015 = vadd.f32 %v725, %v1014
        %v1016 = vpop.f32.mrf.mxu0
        %v1017 = vadd.f32 %v730, %v1016
        %v1018 = vpop.f32.mrf.mxu0
        %v1019 = vadd.f32 %v730, %v1018
        %1020 = vmatprep.mubr.bf16.mxu0 0
        %1021 = vmatmul.mubr.bf16.gmra.mxu0 %v902
        %v1022 = vpop.f32.mrf.mxu0
        %v1023 = vadd.f32 %v735, %v1022
        %v1024 = vpop.f32.mrf.mxu0
        %v1025 = vadd.f32 %v735, %v1024
        %v1026 = vpop.f32.mrf.mxu0
        %v1027 = vadd.f32 %v740, %v1026
        %v1028 = vpop.f32.mrf.mxu0
        %v1029 = vadd.f32 %v740, %v1028
        %1030 = vmatprep.mubr.bf16.mxu0 0
        %1031 = vmatmul.mubr.bf16.gmra.mxu0 %v903
        %v1032 = vpop.f32.mrf.mxu0
        %v1033 = vadd.f32 %v745, %v1032
        %v1034 = vpop.f32.mrf.mxu0
        %v1035 = vadd.f32 %v745, %v1034
        %v1036 = vpop.f32.mrf.mxu0
        %v1037 = vadd.f32 %v750, %v1036
        %v1038 = vpop.f32.mrf.mxu0
        %v1039 = vadd.f32 %v750, %v1038
        %1040 = vmatprep.mubr.bf16.mxu0 0
        %1041 = vmatmul.mubr.bf16.gmra.mxu0 %v904
        %v1042 = vpop.f32.mrf.mxu0
        %v1043 = vadd.f32 %v755, %v1042
        %v1044 = vpop.f32.mrf.mxu0
        %v1045 = vadd.f32 %v755, %v1044
        %v1046 = vpop.f32.mrf.mxu0
        %v1047 = vadd.f32 %v760, %v1046
        %v1048 = vpop.f32.mrf.mxu0
        %v1049 = vadd.f32 %v760, %v1048
        %1050 = vmatprep.mubr.bf16.mxu0 0
        %1051 = vmatmul.mubr.bf16.gmra.mxu0 %v905
        %v1052 = vpop.f32.mrf.mxu0
        %v1053 = vadd.f32 %v765, %v1052
        %v1054 = vpop.f32.mrf.mxu0
        %v1055 = vadd.f32 %v765, %v1054
        %v1056 = vpop.f32.mrf.mxu0
        %v1057 = vadd.f32 %v770, %v1056
        %v1058 = vpop.f32.mrf.mxu0
        %v1059 = vadd.f32 %v770, %v1058
        %1060 = vmatprep.mubr.bf16.mxu0 0
        %1061 = vmatmul.mubr.bf16.gmra.mxu0 %v906
        %v1062 = vpop.f32.mrf.mxu0
        %v1063 = vadd.f32 %v775, %v1062
        %v1064 = vpop.f32.mrf.mxu0
        %v1065 = vadd.f32 %v775, %v1064
        %v1066 = vpop.f32.mrf.mxu0
        %v1067 = vadd.f32 %v780, %v1066
        %v1068 = vpop.f32.mrf.mxu0
        %v1069 = vadd.f32 %v780, %v1068
        %1070 = vmatprep.mubr.bf16.mxu0 0
        %1071 = vmatmul.mubr.bf16.gmra.mxu0 %v907
        %v1072 = vpop.f32.mrf.mxu0
        %v1073 = vadd.f32 %v785, %v1072
        %v1074 = vpop.f32.mrf.mxu0
        %v1075 = vadd.f32 %v785, %v1074
        %v1076 = vpop.f32.mrf.mxu0
        %v1077 = vadd.f32 %v790, %v1076
        %v1078 = vpop.f32.mrf.mxu0
        %v1079 = vadd.f32 %v790, %v1078
        %1080 = vmatprep.mubr.bf16.mxu0 0
        %1081 = vmatmul.mubr.bf16.gmra.mxu0 %v908
        %v1082 = vpop.f32.mrf.mxu0
        %v1083 = vadd.f32 %v795, %v1082
        %v1084 = vpop.f32.mrf.mxu0
        %v1085 = vadd.f32 %v795, %v1084
        %v1086 = vpop.f32.mrf.mxu0
        %v1087 = vadd.f32 %v800, %v1086
        %v1088 = vpop.f32.mrf.mxu0
        %v1089 = vadd.f32 %v800, %v1088
        %1090 = vmatprep.mubr.bf16.mxu0 0
        %1091 = vmatmul.mubr.bf16.gmra.mxu0 %v909
        %v1092 = vpop.f32.mrf.mxu0
        %v1093 = vadd.f32 %v805, %v1092
        %v1094 = vpop.f32.mrf.mxu0
        %v1095 = vadd.f32 %v805, %v1094
        %v1096 = vpop.f32.mrf.mxu0
        %v1097 = vadd.f32 %v810, %v1096
        %v1098 = vpop.f32.mrf.mxu0
        %v1099 = vadd.f32 %v810, %v1098
        %1100 = vmatprep.mubr.bf16.mxu0 0
        %1101 = vmatmul.mubr.bf16.gmra.mxu0 %v910
        %v1102 = vpop.f32.mrf.mxu0
        %v1103 = vadd.f32 %v815, %v1102
        %v1104 = vpop.f32.mrf.mxu0
        %v1105 = vadd.f32 %v815, %v1104
        %v1106 = vpop.f32.mrf.mxu0
        %v1107 = vadd.f32 %v820, %v1106
        %v1108 = vpop.f32.mrf.mxu0
        %v1109 = vadd.f32 %v820, %v1108
        %1110 = vmatprep.mubr.bf16.mxu0 0
        %1111 = vmatmul.mubr.bf16.gmra.mxu0 %v911
        %v1112 = vpop.f32.mrf.mxu0
        %v1113 = vadd.f32 %v825, %v1112
        %v1114 = vpop.f32.mrf.mxu0
        %v1115 = vadd.f32 %v825, %v1114
        %v1116 = vpop.f32.mrf.mxu0
        %v1117 = vadd.f32 %v830, %v1116
        %v1118 = vpop.f32.mrf.mxu0
        %v1119 = vadd.f32 %v830, %v1118
        %1120 = vdwg.mxu0
        %v1121 = vxor.u32 %v1043, 2147483648
        %v1122 = vxor.u32 %v1045, 2147483648
        %v1123 = vxor.u32 %v1047, 2147483648
        %v1124 = vxor.u32 %v1049, 2147483648
        %v1125 = vxor.u32 %v1053, 2147483648
        %v1126 = vxor.u32 %v1055, 2147483648
        %v1127 = vxor.u32 %v1057, 2147483648
        %v1128 = vxor.u32 %v1059, 2147483648
        %v1129 = vxor.u32 %v1063, 2147483648
        %v1130 = vxor.u32 %v1065, 2147483648
        %v1131 = vxor.u32 %v1067, 2147483648
        %v1132 = vxor.u32 %v1069, 2147483648
        %v1133 = vxor.u32 %v1073, 2147483648
        %v1134 = vxor.u32 %v1075, 2147483648
        %v1135 = vxor.u32 %v1077, 2147483648
        %v1136 = vxor.u32 %v1079, 2147483648
        %v1137 = vxor.u32 %v1083, 2147483648
        %v1138 = vxor.u32 %v1085, 2147483648
        %v1139 = vxor.u32 %v1087, 2147483648
        %v1140 = vxor.u32 %v1089, 2147483648
        %v1141 = vxor.u32 %v1093, 2147483648
        %v1142 = vxor.u32 %v1095, 2147483648
        %v1143 = vxor.u32 %v1097, 2147483648
        %v1144 = vxor.u32 %v1099, 2147483648
        %v1145 = vxor.u32 %v1103, 2147483648
        %v1146 = vxor.u32 %v1105, 2147483648
        %v1147 = vxor.u32 %v1107, 2147483648
        %v1148 = vxor.u32 %v1109, 2147483648
        %v1149 = vxor.u32 %v1113, 2147483648
        %v1150 = vxor.u32 %v1115, 2147483648
        %v1151 = vxor.u32 %v1117, 2147483648
        %v1152 = vxor.u32 %v1119, 2147483648
        %v1153 = vmul.f32 %v1121, 1.442695
        %v1154 = vpow.pop %v1153
        %v1155 = vmul.f32 %v1122, 1.442695
        %v1156 = vpow.pop %v1155
        %v1157 = vmul.f32 %v1123, 1.442695
        %v1158 = vpow.pop %v1157
        %v1159 = vmul.f32 %v1124, 1.442695
        %v1160 = vpow.pop %v1159
        %v1161 = vmul.f32 %v1125, 1.442695
        %v1162 = vpow.pop %v1161
        %v1163 = vmul.f32 %v1126, 1.442695
        %v1164 = vpow.pop %v1163
        %v1165 = vmul.f32 %v1127, 1.442695
        %v1166 = vpow.pop %v1165
        %v1167 = vmul.f32 %v1128, 1.442695
        %v1168 = vpow.pop %v1167
        %v1169 = vmul.f32 %v1129, 1.442695
        %v1170 = vpow.pop %v1169
        %v1171 = vmul.f32 %v1130, 1.442695
        %v1172 = vpow.pop %v1171
        %v1173 = vmul.f32 %v1131, 1.442695
        %v1174 = vpow.pop %v1173
        %v1175 = vmul.f32 %v1132, 1.442695
        %v1176 = vpow.pop %v1175
        %v1177 = vmul.f32 %v1133, 1.442695
        %v1178 = vpow.pop %v1177
        %v1179 = vmul.f32 %v1134, 1.442695
        %v1180 = vpow.pop %v1179
        %v1181 = vmul.f32 %v1135, 1.442695
        %v1182 = vpow.pop %v1181
        %v1183 = vmul.f32 %v1136, 1.442695
        %v1184 = vpow.pop %v1183
        %v1185 = vmul.f32 %v1137, 1.442695
        %v1186 = vpow.pop %v1185
        %v1187 = vmul.f32 %v1138, 1.442695
        %v1188 = vpow.pop %v1187
        %v1189 = vmul.f32 %v1139, 1.442695
        %v1190 = vpow.pop %v1189
        %v1191 = vmul.f32 %v1140, 1.442695
        %v1192 = vpow.pop %v1191
        %v1193 = vmul.f32 %v1141, 1.442695
        %v1194 = vpow.pop %v1193
        %v1195 = vmul.f32 %v1142, 1.442695
        %v1196 = vpow.pop %v1195
        %v1197 = vmul.f32 %v1143, 1.442695
        %v1198 = vpow.pop %v1197
        %v1199 = vmul.f32 %v1144, 1.442695
        %v1200 = vpow.pop %v1199
        %v1201 = vmul.f32 %v1145, 1.442695
        %v1202 = vpow.pop %v1201
        %v1203 = vmul.f32 %v1146, 1.442695
        %v1204 = vpow.pop %v1203
        %v1205 = vmul.f32 %v1147, 1.442695
        %v1206 = vpow.pop %v1205
        %v1207 = vmul.f32 %v1148, 1.442695
        %v1208 = vpow.pop %v1207
        %v1209 = vmul.f32 %v1149, 1.442695
        %v1210 = vpow.pop %v1209
        %v1211 = vmul.f32 %v1150, 1.442695
        %v1212 = vpow.pop %v1211
        %v1213 = vmul.f32 %v1151, 1.442695
        %v1214 = vpow.pop %v1213
        %v1215 = vmul.f32 %v1152, 1.442695
        %v1216 = vpow.pop %v1215
        %v1217 = vadd.f32 %v1154, 1.0
        %v1218 = vadd.f32 %v1156, 1.0
        %v1219 = vadd.f32 %v1158, 1.0
        %v1220 = vadd.f32 %v1160, 1.0
        %v1221 = vadd.f32 %v1162, 1.0
        %v1222 = vadd.f32 %v1164, 1.0
        %v1223 = vadd.f32 %v1166, 1.0
        %v1224 = vadd.f32 %v1168, 1.0
        %v1225 = vadd.f32 %v1170, 1.0
        %v1226 = vadd.f32 %v1172, 1.0
        %v1227 = vadd.f32 %v1174, 1.0
        %v1228 = vadd.f32 %v1176, 1.0
        %v1229 = vadd.f32 %v1178, 1.0
        %v1230 = vadd.f32 %v1180, 1.0
        %v1231 = vadd.f32 %v1182, 1.0
        %v1232 = vadd.f32 %v1184, 1.0
        %v1233 = vadd.f32 %v1186, 1.0
        %v1234 = vadd.f32 %v1188, 1.0
        %v1235 = vadd.f32 %v1190, 1.0
        %v1236 = vadd.f32 %v1192, 1.0
        %v1237 = vadd.f32 %v1194, 1.0
        %v1238 = vadd.f32 %v1196, 1.0
        %v1239 = vadd.f32 %v1198, 1.0
        %v1240 = vadd.f32 %v1200, 1.0
        %v1241 = vadd.f32 %v1202, 1.0
        %v1242 = vadd.f32 %v1204, 1.0
        %v1243 = vadd.f32 %v1206, 1.0
        %v1244 = vadd.f32 %v1208, 1.0
        %v1245 = vadd.f32 %v1210, 1.0
        %v1246 = vadd.f32 %v1212, 1.0
        %v1247 = vadd.f32 %v1214, 1.0
        %v1248 = vadd.f32 %v1216, 1.0
        %v1249 = vrcp.pop %v1217
        %v1250 = vmul.f32 1.0, %v1249
        %v1251 = vrcp.pop %v1218
        %v1252 = vmul.f32 1.0, %v1251
        %v1253 = vrcp.pop %v1219
        %v1254 = vmul.f32 1.0, %v1253
        %v1255 = vrcp.pop %v1220
        %v1256 = vmul.f32 1.0, %v1255
        %v1257 = vrcp.pop %v1221
        %v1258 = vmul.f32 1.0, %v1257
        %v1259 = vrcp.pop %v1222
        %v1260 = vmul.f32 1.0, %v1259
        %v1261 = vrcp.pop %v1223
        %v1262 = vmul.f32 1.0, %v1261
        %v1263 = vrcp.pop %v1224
        %v1264 = vmul.f32 1.0, %v1263
        %v1265 = vrcp.pop %v1225
        %v1266 = vmul.f32 1.0, %v1265
        %v1267 = vrcp.pop %v1226
        %v1268 = vmul.f32 1.0, %v1267
        %v1269 = vrcp.pop %v1227
        %v1270 = vmul.f32 1.0, %v1269
        %v1271 = vrcp.pop %v1228
        %v1272 = vmul.f32 1.0, %v1271
        %v1273 = vrcp.pop %v1229
        %v1274 = vmul.f32 1.0, %v1273
        %v1275 = vrcp.pop %v1230
        %v1276 = vmul.f32 1.0, %v1275
        %v1277 = vrcp.pop %v1231
        %v1278 = vmul.f32 1.0, %v1277
        %v1279 = vrcp.pop %v1232
        %v1280 = vmul.f32 1.0, %v1279
        %v1281 = vrcp.pop %v1233
        %v1282 = vmul.f32 1.0, %v1281
        %v1283 = vrcp.pop %v1234
        %v1284 = vmul.f32 1.0, %v1283
        %v1285 = vrcp.pop %v1235
        %v1286 = vmul.f32 1.0, %v1285
        %v1287 = vrcp.pop %v1236
        %v1288 = vmul.f32 1.0, %v1287
        %v1289 = vrcp.pop %v1237
        %v1290 = vmul.f32 1.0, %v1289
        %v1291 = vrcp.pop %v1238
        %v1292 = vmul.f32 1.0, %v1291
        %v1293 = vrcp.pop %v1239
        %v1294 = vmul.f32 1.0, %v1293
        %v1295 = vrcp.pop %v1240
        %v1296 = vmul.f32 1.0, %v1295
        %v1297 = vrcp.pop %v1241
        %v1298 = vmul.f32 1.0, %v1297
        %v1299 = vrcp.pop %v1242
        %v1300 = vmul.f32 1.0, %v1299
        %v1301 = vrcp.pop %v1243
        %v1302 = vmul.f32 1.0, %v1301
        %v1303 = vrcp.pop %v1244
        %v1304 = vmul.f32 1.0, %v1303
        %v1305 = vrcp.pop %v1245
        %v1306 = vmul.f32 1.0, %v1305
        %v1307 = vrcp.pop %v1246
        %v1308 = vmul.f32 1.0, %v1307
        %v1309 = vrcp.pop %v1247
        %v1310 = vmul.f32 1.0, %v1309
        %v1311 = vrcp.pop %v1248
        %v1312 = vmul.f32 1.0, %v1311
        %v1313 = vmul.f32 %v963, %v1250
        %v1314 = vmul.f32 %v965, %v1252
        %v1315 = vmul.f32 %v967, %v1254
        %v1316 = vmul.f32 %v969, %v1256
        %v1317 = vmul.f32 %v973, %v1258
        %v1318 = vmul.f32 %v975, %v1260
        %v1319 = vmul.f32 %v977, %v1262
        %v1320 = vmul.f32 %v979, %v1264
        %v1321 = vmul.f32 %v983, %v1266
        %v1322 = vmul.f32 %v985, %v1268
        %v1323 = vmul.f32 %v987, %v1270
        %v1324 = vmul.f32 %v989, %v1272
        %v1325 = vmul.f32 %v993, %v1274
        %v1326 = vmul.f32 %v995, %v1276
        %v1327 = vmul.f32 %v997, %v1278
        %v1328 = vmul.f32 %v999, %v1280
        %v1329 = vmul.f32 %v1003, %v1282
        %v1330 = vmul.f32 %v1005, %v1284
        %v1331 = vmul.f32 %v1007, %v1286
        %v1332 = vmul.f32 %v1009, %v1288
        %v1333 = vmul.f32 %v1013, %v1290
        %v1334 = vmul.f32 %v1015, %v1292
        %v1335 = vmul.f32 %v1017, %v1294
        %v1336 = vmul.f32 %v1019, %v1296
        %v1337 = vmul.f32 %v1023, %v1298
        %v1338 = vmul.f32 %v1025, %v1300
        %v1339 = vmul.f32 %v1027, %v1302
        %v1340 = vmul.f32 %v1029, %v1304
        %v1341 = vmul.f32 %v1033, %v1306
        %v1342 = vmul.f32 %v1035, %v1308
        %v1343 = vmul.f32 %v1037, %v1310
        %v1344 = vmul.f32 %v1039, %v1312
        %1345 = vst [vmem:[%s268] sm:$0xff] %v1313
        %1346 = vst [vmem:[%s268 + $0x8] sm:$0xff] %v1314
        %1347 = vst [vmem:[%s268 + $0x10] sm:$0xff] %v1315
        %1348 = vst [vmem:[%s268 + $0x18] sm:$0xff] %v1316
        %1349 = vst [vmem:[%s268 + $0x20] sm:$0xff] %v1317
        %1350 = vst [vmem:[%s268 + $0x28] sm:$0xff] %v1318
        %1351 = vst [vmem:[%s268 + $0x30] sm:$0xff] %v1319
        %1352 = vst [vmem:[%s268 + $0x38] sm:$0xff] %v1320
        %1353 = vst [vmem:[%s268 + $0x40] sm:$0xff] %v1321
        %1354 = vst [vmem:[%s268 + $0x48] sm:$0xff] %v1322
        %1355 = vst [vmem:[%s268 + $0x50] sm:$0xff] %v1323
        %1356 = vst [vmem:[%s268 + $0x58] sm:$0xff] %v1324
        %1357 = vst [vmem:[%s268 + $0x60] sm:$0xff] %v1325
        %1358 = vst [vmem:[%s268 + $0x68] sm:$0xff] %v1326
        %1359 = vst [vmem:[%s268 + $0x70] sm:$0xff] %v1327
        %1360 = vst [vmem:[%s268 + $0x78] sm:$0xff] %v1328
        %1361 = vst [vmem:[%s268 + $0x80] sm:$0xff] %v1329
        %1362 = vst [vmem:[%s268 + $0x88] sm:$0xff] %v1330
        %1363 = vst [vmem:[%s268 + $0x90] sm:$0xff] %v1331
        %1364 = vst [vmem:[%s268 + $0x98] sm:$0xff] %v1332
        %1365 = vst [vmem:[%s268 + $0xa0] sm:$0xff] %v1333
        %1366 = vst [vmem:[%s268 + $0xa8] sm:$0xff] %v1334
        %1367 = vst [vmem:[%s268 + $0xb0] sm:$0xff] %v1335
        %1368 = vst [vmem:[%s268 + $0xb8] sm:$0xff] %v1336
        %1369 = vst [vmem:[%s268 + $0xc0] sm:$0xff] %v1337
        %1370 = vst [vmem:[%s268 + $0xc8] sm:$0xff] %v1338
        %1371 = vst [vmem:[%s268 + $0xd0] sm:$0xff] %v1339
        %1372 = vst [vmem:[%s268 + $0xd8] sm:$0xff] %v1340
        %1373 = vst [vmem:[%s268 + $0xe0] sm:$0xff] %v1341
        %1374 = vst [vmem:[%s268 + $0xe8] sm:$0xff] %v1342
        %1375 = vst [vmem:[%s268 + $0xf0] sm:$0xff] %v1343
        %1376 = vst [vmem:[%s268 + $0xf8] sm:$0xff] %v1344
        %s1377 = sand.u32 %s109, 1
        %s1378 = scalar_lea.sflag [#allocation4], %s1377
        %s1379 = sand.u32 %s109, 1
        %s1380 = smul.addr %s1379, 256
        %s1381 = scalar_lea.vmem [#allocation3], %s1380
        // Predicated region
        $region56: #{s4_block_forward.1} parent=50 // pred_check
          %p1382 = pneg %p119
        $region57: #{s4_block_forward.1} parent=50 // pred_check_branch
          %1384 = sbr.rel (%p1382) target = $region59
        $region58: #{s4_block_forward.1} parent=50 // pred_region
          %s1385 = smul.u32 2, %s22
          %s1387 = ssub.s32 4096, 4096
          %1388 = vsyncadd %s1378, %s1387
          %s1389 = smul.addr %s21, 64
          %s1390 = sadd.s32 %s1385, %s1389
          %s1391 = smul.addr %s1390, 128
          %s1392 = scalar_lea.hbm %s3, %s1391
          %s1393 = sshll.u32 %s1381, 4
          %s1394 = int_to_ptr.vmem [resolvable:$true] %s1393
          %1399 = dma.vmem_to_hbm [thread:$0]  %s1394, 4096, %s1392, %s1378, 256, 512, 16
        $region59: #{s4_block_forward.1} parent=50 // pred_fallthru
          _
      $region51: #{s4_block_forward.1} parent=5 // pred_fallthru
        _
      %p1400 = scmp.le.s32.totalorder 2, %s12
      // Predicated region
      $region60: #{s4_block_forward.1} parent=5 // pred_check
        %p1401 = pneg %p1400
      $region61: #{s4_block_forward.1} parent=5 // pred_check_branch
        %1403 = sbr.rel (%p1401) target = $region63
      $region62: #{s4_block_forward.1} parent=5 // pred_region
        %s1404 = ssub.s32 %s12, 2
        // Predicated region
        $region64: #{s4_block_forward.1} parent=62 // pred_check
          %p1405 = pneg %p125
        $region65: #{s4_block_forward.1} parent=62 // pred_check_branch
          %1407 = sbr.rel (%p1405) target = $region67
        $region66: #{s4_block_forward.1} parent=62 // pred_region
          %s1408 = sand.u32 %s110, 1
          %s1409 = scalar_lea.sflag [#allocation4], %s1408
          %s1410 = sand.u32 %s110, 1
          %s1411 = smul.addr %s1410, 256
          %s1412 = scalar_lea.vmem [#allocation3], %s1411
          %1413 = dma.done %s1409, 4096
        $region67: #{s4_block_forward.1} parent=62 // pred_fallthru
          _
      $region63: #{s4_block_forward.1} parent=5 // pred_fallthru
        _
    $region6: #{s4_block_forward.1} parent=1 // loop_footer
      %s16 = sadd.s32 1, %s12
    $region7: #{s4_block_forward.1} parent=1 // loop_footer_branch
      %11 = sbr.rel target = $region3
    $region8: #{s4_block_forward.1} parent=1 // loop_exit
      _
    %1414 = vsyncpa [#allocation4], 1
    %s1415 = scalar_lea.sflag [#allocation4], 1
    %1416 = vsyncpa %s1415, 1

</llo_original>
